<compile_context>
chip_gen: v7x
topology: tpu7x:2x2x1
jax: 0.10.0
libtpu: 0.0.40
codegen_flags: <defaults>
</compile_context>

<pallas_src>
import functools

import numpy as np
import jax
import jax.numpy as jnp
from jax.experimental import pallas as pl
from jax.experimental.pallas import tpu as pltpu

_LANE = 128


# ----------------------------------------------------------------------------
# small helpers
# ----------------------------------------------------------------------------
def _round_up(x, m):
    return ((x + m - 1) // m) * m


def _silu(z):
    # z * sigmoid(z) == z * 0.5 * (1 + tanh(z/2)); tanh goes to the EUP slot.
    return z * (0.5 * jnp.tanh(0.5 * z) + 0.5)


@functools.lru_cache(maxsize=None)
def _tc_per_chip():
    """Best-effort TensorCore-per-chip detection (2 on v7x-style chips)."""
    try:
        kind = jax.devices()[0].device_kind.lower()
    except Exception:
        return 1
    return 2 if ("v7" in kind or "7x" in kind or "tpu7" in kind) else 1


def _row_tiling(n, n_cores):
    """(padded_rows, row_tile). Rows live on the sublane axis."""
    if n <= _LANE:                          # tiny batch: pad to x8, single step
        npad = _round_up(max(n, 8), 8)
        return npad, npad
    npad = _round_up(n, _LANE)
    # Prefer >=2 grid steps on dual-TC chips; otherwise fold everything into a
    # single step (fixed per-step overhead dominates at these problem sizes).
    target = npad // 2 if (n_cores >= 2 and (npad // 2) % _LANE == 0) else npad
    target = min(target, 1024)              # VMEM headroom cap
    tn = _LANE
    for cand in range(target, _LANE - 1, -_LANE):
        if npad % cand == 0:
            tn = cand
            break
    return npad, tn


@functools.lru_cache(maxsize=None)
def _constants(na):
    """Selector / group-sum matrices (built once per `na`, lane-aligned)."""
    lq = _round_up(2 * na, _LANE)           # lane chunk holding q1 / q2
    lg = _round_up(na, _LANE)               # lane chunk holding one agent-group

    # R group sums over the stacked [A_R | A_J] activation (32*na columns):
    # column g*na+j sums rows r*na+j for r in [4g, 4g+4); J-half rows are zero.
    gr = np.zeros((32 * na, 4 * na), np.float32)
    rows = np.arange(16 * na)
    gr[rows, ((rows // na) // 4) * na + (rows % na)] = 1.0

    # J: total row-sum over the J half of the stacked activation.
    jmask = np.zeros((1, 32 * na), np.float32)
    jmask[:, 16 * na:] = 1.0

    # H group sums, lane-aligned: column g*lg + j sums rows r*na+j, r in [5g,5g+5).
    gh = np.zeros((25 * na, 5 * lg), np.float32)
    rows = np.arange(25 * na)
    gh[rows, ((rows // na) // 5) * lg + (rows % na)] = 1.0

    # q selection: q[i] = x[6*(i//4) + i%4]; q1 -> lanes [0, 2na), q2 -> [lq, lq+2na).
    qsel = np.zeros((6 * na, 2 * lq), np.float32)
    i = np.arange(4 * na)
    src = 6 * (i // 4) + (i % 4)
    dst = np.where(i < 2 * na, i, lq + (i - 2 * na))
    qsel[src, dst] = 1.0

    # pair sum: output lane j accumulates q-product lanes 2j and 2j+1.
    pair = np.zeros((lq, lg), np.float32)
    i = np.arange(2 * na)
    pair[i, i // 2] = 1.0

    return gr, jmask, gh, qsel, pair, lq, lg


def _kron_eye2(m):
    """Batched torch.kron(m, eye(2)) for m of shape (B, n, n)."""
    B, n, _ = m.shape
    eye2 = jnp.eye(2, dtype=m.dtype)
    return jnp.einsum("bij,kl->bikjl", m, eye2).reshape(B, 2 * n, 2 * n)


# ----------------------------------------------------------------------------
# fused kernel: GNN_R + GNN_J + GNN_H learnable forwards
# ----------------------------------------------------------------------------
def _fused_kernel(xrj_ref, xh_ref, arj_ref, ah_ref, gr_ref, jmask_ref, gh_ref,
                  qsel_ref, pair_ref, rsq_ref, sj_ref, h_ref):
    f32 = jnp.float32
    dn = (((1,), (0,)), ((), ()))       # plain row-major matmul
    dt = (((1,), (1,)), ((), ()))       # contract both operands' last dim
    dl = (((0,), (1,)), ((), ()))       # contract lhs dim0 with rhs dim1

    # ------------------ GNN_R / GNN_J (shared stacked activation) ----------
    xrj = xrj_ref[...]                                                 # (tn, 4na)
    act = _silu(jax.lax.dot_general(xrj.astype(jnp.bfloat16), arj_ref[...], dn,
                                    preferred_element_type=f32))       # (tn, 32na)
    # squared group sums, emitted transposed (4na, tn): lane-dense stores
    rt = jax.lax.dot_general(gr_ref[...], act, dl,
                             preferred_element_type=f32)               # (4na, tn)
    rsq_ref[...] = rt * rt
    # per-row total sum of the J half -> (1, tn) lane-dense
    sj_ref[...] = jax.lax.dot_general(jmask_ref[...], act, dt,
                                      preferred_element_type=f32)

    # ------------------ GNN_H ----------------------------------------------
    xh = xh_ref[...]                                                   # (tn, 6na)
    acth = _silu(jax.lax.dot_general(xh.astype(jnp.bfloat16), ah_ref[...], dn,
                                     preferred_element_type=f32))      # (tn, 25na)
    s = jax.lax.dot_general(acth * acth, gh_ref[...], dn,
                            preferred_element_type=f32)                # (tn, 5*lg)
    q = jax.lax.dot_general(xh, qsel_ref[...], dn,
                            preferred_element_type=f32)                # (tn, 2*lq)
    lq = qsel_ref.shape[1] // 2
    lg = gh_ref.shape[1] // 5
    q1, q2 = q[:, :lq], q[:, lq:]
    pair = pair_ref[...]
    a1 = jax.lax.dot_general(q1 * q1, pair, dn, preferred_element_type=f32)
    c = jax.lax.dot_general(q1 * q2, pair, dn, preferred_element_type=f32)
    a2 = jax.lax.dot_general(q2 * q2, pair, dn, preferred_element_type=f32)
    s11, s12 = s[:, 0 * lg:1 * lg], s[:, 1 * lg:2 * lg]
    s21, s22 = s[:, 2 * lg:3 * lg], s[:, 3 * lg:4 * lg]
    spp = s[:, 4 * lg:5 * lg]
    # q M q^T + sum(Mpp); padded lanes of every term are zero.
    terms = s11 * a1 + (s12 + s21) * c + s22 * a2 + spp                # (tn, lg)
    ones = jnp.ones((1, lg), f32)
    h_ref[...] = jax.lax.dot_general(ones, terms, dt,
                                     preferred_element_type=f32)       # (1, tn)


# ----------------------------------------------------------------------------
# wrapper: one pallas_call + O(na^2) host-side assembly glue (all jitted)
# ----------------------------------------------------------------------------
def _gnn_fused(A_R, A_J, A_H, x_rj, x_h):
    N, d4 = x_rj.shape
    na = d4 // 4
    B = N // na
    npad, tn = _row_tiling(N, _tc_per_chip())

    gr, jmask, gh, qsel, pair, lq, lg = _constants(na)

    xrj = x_rj.astype(jnp.float32)
    xh = x_h.astype(jnp.float32)
    if npad != N:
        xrj = jnp.pad(xrj, ((0, npad - N), (0, 0)))
        xh = jnp.pad(xh, ((0, npad - N), (0, 0)))
    a_rj = jnp.concatenate([A_R, A_J], axis=1).astype(jnp.bfloat16)    # (4na, 32na)
    a_h = A_H.astype(jnp.bfloat16)                                     # (6na, 25na)

    flops_per_row = (2 * 4 * na * 32 * na + 2 * 32 * na * 4 * na + 2 * 32 * na
                     + 2 * 6 * na * 25 * na + 2 * 25 * na * 5 * lg
                     + 2 * 6 * na * 2 * lq + 6 * lq * lg + 12 * lg)
    cost = pl.CostEstimate(
        flops=int(npad * flops_per_row),
        transcendentals=int(npad * (32 * na + 25 * na)),
        bytes_accessed=int(4 * npad * (4 * na + 6 * na + 4 * na + 2)
                           + 2 * (a_rj.size + a_h.size)
                           + 4 * (gr.size + jmask.size + gh.size
                                  + qsel.size + pair.size)))

    rsq_t, sj, hh = pl.pallas_call(
        _fused_kernel,
        out_shape=(jax.ShapeDtypeStruct((4 * na, npad), jnp.float32),
                   jax.ShapeDtypeStruct((1, npad), jnp.float32),
                   jax.ShapeDtypeStruct((1, npad), jnp.float32)),
        grid=(npad // tn,),
        in_specs=[
            pl.BlockSpec((tn, 4 * na), lambda i: (i, 0)),
            pl.BlockSpec((tn, 6 * na), lambda i: (i, 0)),
            pl.BlockSpec(a_rj.shape, lambda i: (0, 0)),
            pl.BlockSpec(a_h.shape, lambda i: (0, 0)),
            pl.BlockSpec(gr.shape, lambda i: (0, 0)),
            pl.BlockSpec(jmask.shape, lambda i: (0, 0)),
            pl.BlockSpec(gh.shape, lambda i: (0, 0)),
            pl.BlockSpec(qsel.shape, lambda i: (0, 0)),
            pl.BlockSpec(pair.shape, lambda i: (0, 0)),
        ],
        out_specs=(pl.BlockSpec((4 * na, tn), lambda i: (0, i)),
                   pl.BlockSpec((1, tn), lambda i: (0, i)),
                   pl.BlockSpec((1, tn), lambda i: (0, i))),
        compiler_params=pltpu.CompilerParams(dimension_semantics=("parallel",)),
        cost_estimate=cost,
    )(xrj, xh, a_rj, a_h, jnp.asarray(gr), jnp.asarray(jmask), jnp.asarray(gh),
      jnp.asarray(qsel), jnp.asarray(pair))

    sr_sq = rsq_t[:, :N].T            # (N, 4*na), squared group sums S11|S12|S21|S22
    R = _assemble_R_sq(sr_sq, B, na)
    J = _assemble_J(sj[0, :N], B, na)
    H = hh[0, :N].reshape(N, 1)
    return R, J, H


gnn_fused_forward = jax.jit(_gnn_fused)


def _assemble_R_sq(sr_sq, B, na):
    # sr_sq already holds the squared group sums (square folded into the kernel;
    # squaring commutes with kron(.,eye2)/concat since off-pattern entries are 0).
    r11 = sr_sq[:, 0 * na:1 * na].reshape(B, na, na)
    r12 = sr_sq[:, 1 * na:2 * na].reshape(B, na, na)
    r21 = sr_sq[:, 2 * na:3 * na].reshape(B, na, na)
    r22 = sr_sq[:, 3 * na:4 * na].reshape(B, na, na)
    rfull = jnp.concatenate(
        [jnp.concatenate([_kron_eye2(r11), _kron_eye2(r21)], axis=1),
         jnp.concatenate([_kron_eye2(r12), _kron_eye2(r22)], axis=1)], axis=2)
    rupper = rfull + jnp.swapaxes(rfull, 1, 2)
    eye = jnp.eye(4 * na, dtype=jnp.float32)[None]
    rdiag = rupper * (1.0 - eye)
    rout = rupper * eye
    return rout + eye * jnp.sum(rdiag, axis=2, keepdims=True) - rdiag


def _assemble_J(sj, B, na):
    d = jnp.repeat(sj.reshape(B, na), 2, axis=-1)    # diag of kron(diag(j12), eye2)
    n2 = 2 * na
    idx = jnp.arange(n2)
    z = jnp.zeros((B, n2, n2), jnp.float32)
    j12 = z.at[:, idx, idx].set(d)
    j21 = z.at[:, idx, idx].set(-d)
    top = jnp.concatenate([z, j12], axis=2)
    bot = jnp.concatenate([j21, z], axis=2)
    return jnp.concatenate([top, bot], axis=1)


# ----------------------------------------------------------------------------
# pure-JAX references (line-by-line transcription of the torch modules)
# ----------------------------------------------------------------------------
def gnn_h_reference(A, x):
    N, d = x.shape
    na = d // 6
    M = jax.nn.silu(x @ A).reshape(N, 25, na)
    kron2 = lambda v: jnp.repeat(v, 2, axis=-1)
    M11 = kron2(jnp.sum(M[:, 0:5] ** 2, axis=1))
    M12 = kron2(jnp.sum(M[:, 5:10] ** 2, axis=1))
    M21 = kron2(jnp.sum(M[:, 10:15] ** 2, axis=1))
    M22 = kron2(jnp.sum(M[:, 15:20] ** 2, axis=1))
    Mpp = jnp.sum(M[:, 20:25] ** 2, axis=1)
    q = jnp.zeros((N, 4 * na), x.dtype)
    q = q.at[:, 0::4].set(x[:, 0::6])
    q = q.at[:, 1::4].set(x[:, 1::6])
    q = q.at[:, 2::4].set(x[:, 2::6])
    q = q.at[:, 3::4].set(x[:, 3::6])
    q1, q2 = q[:, :2 * na], q[:, 2 * na:]
    quad = jnp.sum(q1 * q1 * M11 + q1 * q2 * M12 + q2 * q1 * M21 + q2 * q2 * M22,
                   axis=1, keepdims=True)
    return quad + jnp.sum(Mpp, axis=1, keepdims=True)


def gnn_r_reference(A, x):
    N, d = x.shape
    na = d // 4
    B = N // na
    R = jax.nn.silu(x @ A).reshape(N, 16, na)
    grp = lambda lo, hi: jnp.sum(R[:, lo:hi], axis=1).reshape(B, na, na)
    rfull = jnp.concatenate(
        [jnp.concatenate([_kron_eye2(grp(0, 4)), _kron_eye2(grp(8, 12))], axis=1),
         jnp.concatenate([_kron_eye2(grp(4, 8)), _kron_eye2(grp(12, 16))], axis=1)],
        axis=2) ** 2
    rupper = rfull + jnp.swapaxes(rfull, 1, 2)
    idx = jnp.arange(4 * na)
    rdiag = rupper.at[:, idx, idx].set(0.0)
    eye = jnp.eye(4 * na, dtype=x.dtype)[None]
    rout = eye * rupper
    return rout + eye * jnp.sum(rdiag, axis=2, keepdims=True) - rdiag


def gnn_j_reference(A, x):
    N, d = x.shape
    na = d // 4
    B = N // na
    J = jax.nn.silu(x @ A).reshape(N, 16, na)
    j12 = jnp.sum(J, axis=(1, 2)).reshape(B, na)
    idx = jnp.arange(na)
    zna = jnp.zeros((B, na, na), x.dtype)
    J12 = _kron_eye2(zna.at[:, idx, idx].set(j12))
    J21 = _kron_eye2(zna.at[:, idx, idx].set(-j12))
    z2 = jnp.zeros((B, 2 * na, 2 * na), x.dtype)
    return jnp.concatenate([jnp.concatenate([z2, J21], axis=1),
                            jnp.concatenate([J12, z2], axis=1)], axis=2)


# ----------------------------------------------------------------------------
# demo / self-check
# ----------------------------------------------------------------------------
if __name__ == "__main__":
    key = jax.random.PRNGKey(0)
    na, B = 8, 16                       # agents, batch -> N = B*na = 128 rows
    N = B * na
    ks = jax.random.split(key, 5)
    # nn.Parameter(0.01 * randn(d, h)) for each sub-module of learnSystemGNN
    A_R = 0.01 * jax.random.normal(ks[0], (4 * na, 16 * na), jnp.float32)
    A_J = 0.01 * jax.random.normal(ks[1], (4 * na, 16 * na), jnp.float32)
    A_H = 0.01 * jax.random.normal(ks[2], (6 * na, 25 * na), jnp.float32)
    # stand-ins for the state_h tensors flocking_dynamics feeds the sub-modules
    x_rj = jax.random.normal(ks[3], (N, 4 * na), jnp.float32)
    x_h = jax.random.normal(ks[4], (N, 6 * na), jnp.float32)

    R, J, H = jax.block_until_ready(gnn_fused_forward(A_R, A_J, A_H, x_rj, x_h))

    R_ref = gnn_r_reference(A_R, x_rj)
    J_ref = gnn_j_reference(A_J, x_rj)
    H_ref = gnn_h_reference(A_H, x_h)

    assert R.shape == (B, 4 * na, 4 * na), R.shape
    assert J.shape == (B, 4 * na, 4 * na), J.shape
    assert H.shape == (N, 1), H.shape
    # bf16 MXU operands inside the kernel -> compare against f32 references
    # with a correspondingly relaxed tolerance.
    tol = dict(rtol=2e-2, atol=1e-2)
    assert jnp.allclose(R, R_ref, **tol), float(jnp.max(jnp.abs(R - R_ref)))
    assert jnp.allclose(J, J_ref, **tol), float(jnp.max(jnp.abs(J - J_ref)))
    assert jnp.allclose(H, H_ref, **tol), float(jnp.max(jnp.abs(H - H_ref)))
    print("KERNEL_OK")
</pallas_src>

<mosaic_0001>
module attributes {stable_mosaic.version = 11 : i64} {
  func.func @_fused_kernel(%arg0: i32, %arg1: memref<128x32xf32, #tpu.memory_space<vmem>>, %arg2: memref<128x48xf32, #tpu.memory_space<vmem>>, %arg3: memref<32x256xbf16, #tpu.memory_space<vmem>>, %arg4: memref<48x200xbf16, #tpu.memory_space<vmem>>, %arg5: memref<256x32xf32, #tpu.memory_space<vmem>>, %arg6: memref<1x256xf32, #tpu.memory_space<vmem>>, %arg7: memref<200x640xf32, #tpu.memory_space<vmem>>, %arg8: memref<48x256xf32, #tpu.memory_space<vmem>>, %arg9: memref<128x128xf32, #tpu.memory_space<vmem>>, %arg10: memref<32x128xf32, #tpu.memory_space<vmem>>, %arg11: memref<1x128xf32, #tpu.memory_space<vmem>>, %arg12: memref<1x128xf32, #tpu.memory_space<vmem>>) attributes {dimension_semantics = [#tpu.dimension_semantics<parallel>], iteration_bounds = array<i64: 1>, scalar_prefetch = 0 : i64, scratch_operands = 0 : i64, tpu.core_type = #tpu.core_type<tc>, window_params = [{transform_indices = @transform_0, window_bounds = array<i64: 128, 32>}, {transform_indices = @transform_1, window_bounds = array<i64: 128, 48>}, {pipeline_mode = #tpu.pipeline_mode<synchronous>, transform_indices = @transform_2, window_bounds = array<i64: 32, 256>}, {pipeline_mode = #tpu.pipeline_mode<synchronous>, transform_indices = @transform_3, window_bounds = array<i64: 48, 200>}, {pipeline_mode = #tpu.pipeline_mode<synchronous>, transform_indices = @transform_4, window_bounds = array<i64: 256, 32>}, {pipeline_mode = #tpu.pipeline_mode<synchronous>, transform_indices = @transform_5, window_bounds = array<i64: 1, 256>}, {pipeline_mode = #tpu.pipeline_mode<synchronous>, transform_indices = @transform_6, window_bounds = array<i64: 200, 640>}, {pipeline_mode = #tpu.pipeline_mode<synchronous>, transform_indices = @transform_7, window_bounds = array<i64: 48, 256>}, {pipeline_mode = #tpu.pipeline_mode<synchronous>, transform_indices = @transform_8, window_bounds = array<i64: 128, 128>}, {transform_indices = @transform_9, window_bounds = array<i64: 32, 128>}, {transform_indices = @transform_10, window_bounds = array<i64: 1, 128>}, {transform_indices = @transform_11, window_bounds = array<i64: 1, 128>}]} {
    %c0 = arith.constant 0 : index
    %c0_0 = arith.constant 0 : index
    %0 = vector.load %arg1[%c0, %c0_0] : memref<128x32xf32, #tpu.memory_space<vmem>>, vector<128x32xf32>
    %1 = arith.truncf %0 : vector<128x32xf32> to vector<128x32xbf16>
    %c0_1 = arith.constant 0 : index
    %c0_2 = arith.constant 0 : index
    %2 = vector.load %arg3[%c0_1, %c0_2] : memref<32x256xbf16, #tpu.memory_space<vmem>>, vector<32x256xbf16>
    %cst = arith.constant dense<0.000000e+00> : vector<128x256xf32>
    %3 = tpu.matmul %1, %2, %cst {dimension_numbers = #tpu.dot_dimension_numbers<[1], [0], [0], [1], [0, 0, 1, 1], [], []>} : vector<128x32xbf16>, vector<32x256xbf16>, vector<128x256xf32> -> vector<128x256xf32>
    %cst_3 = arith.constant 5.000000e-01 : f32
    %4 = vector.broadcast %cst_3 : f32 to vector<128x256xf32>
    %5 = arith.mulf %4, %3 : vector<128x256xf32>
    %6 = math.tanh %5 : vector<128x256xf32>
    %cst_4 = arith.constant 5.000000e-01 : f32
    %7 = vector.broadcast %cst_4 : f32 to vector<128x256xf32>
    %8 = arith.mulf %7, %6 : vector<128x256xf32>
    %cst_5 = arith.constant 5.000000e-01 : f32
    %9 = vector.broadcast %cst_5 : f32 to vector<128x256xf32>
    %10 = arith.addf %8, %9 : vector<128x256xf32>
    %11 = arith.mulf %3, %10 : vector<128x256xf32>
    %c0_6 = arith.constant 0 : index
    %c0_7 = arith.constant 0 : index
    %12 = vector.load %arg5[%c0_6, %c0_7] : memref<256x32xf32, #tpu.memory_space<vmem>>, vector<256x32xf32>
    %cst_8 = arith.constant dense<0.000000e+00> : vector<32x128xf32>
    %13 = tpu.matmul %12, %11, %cst_8 {dimension_numbers = #tpu.dot_dimension_numbers<[0], [1], [1], [0], [0, 1, 1, 0], [], []>} : vector<256x32xf32>, vector<128x256xf32>, vector<32x128xf32> -> vector<32x128xf32>
    %14 = arith.mulf %13, %13 : vector<32x128xf32>
    %c0_9 = arith.constant 0 : index
    %c0_10 = arith.constant 0 : index
    %15 = vector.load %arg10[%c0_9, %c0_10] : memref<32x128xf32, #tpu.memory_space<vmem>>, vector<32x128xf32>
    tpu.vector_store %arg10[%c0_9, %c0_10], %14 {strides = array<i32>} : memref<32x128xf32, #tpu.memory_space<vmem>>, vector<32x128xf32>,
    %c0_11 = arith.constant 0 : index
    %c0_12 = arith.constant 0 : index
    %16 = vector.load %arg6[%c0_11, %c0_12] : memref<1x256xf32, #tpu.memory_space<vmem>>, vector<1x256xf32>
    %cst_13 = arith.constant dense<0.000000e+00> : vector<1x128xf32>
    %17 = tpu.matmul %16, %11, %cst_13 {dimension_numbers = #tpu.dot_dimension_numbers<[1], [1], [0], [0], [0, 0, 1, 0], [], []>} : vector<1x256xf32>, vector<128x256xf32>, vector<1x128xf32> -> vector<1x128xf32>
    %c0_14 = arith.constant 0 : index
    %c0_15 = arith.constant 0 : index
    %18 = vector.load %arg11[%c0_14, %c0_15] : memref<1x128xf32, #tpu.memory_space<vmem>>, vector<1x128xf32>
    tpu.vector_store %arg11[%c0_14, %c0_15], %17 {strides = array<i32>} : memref<1x128xf32, #tpu.memory_space<vmem>>, vector<1x128xf32>,
    %c0_16 = arith.constant 0 : index
    %c0_17 = arith.constant 0 : index
    %19 = vector.load %arg2[%c0_16, %c0_17] : memref<128x48xf32, #tpu.memory_space<vmem>>, vector<128x48xf32>
    %20 = arith.truncf %19 : vector<128x48xf32> to vector<128x48xbf16>
    %c0_18 = arith.constant 0 : index
    %c0_19 = arith.constant 0 : index
    %21 = vector.load %arg4[%c0_18, %c0_19] : memref<48x200xbf16, #tpu.memory_space<vmem>>, vector<48x200xbf16>
    %cst_20 = arith.constant dense<0.000000e+00> : vector<128x200xf32>
    %22 = tpu.matmul %20, %21, %cst_20 {dimension_numbers = #tpu.dot_dimension_numbers<[1], [0], [0], [1], [0, 0, 1, 1], [], []>} : vector<128x48xbf16>, vector<48x200xbf16>, vector<128x200xf32> -> vector<128x200xf32>
    %cst_21 = arith.constant 5.000000e-01 : f32
    %23 = vector.broadcast %cst_21 : f32 to vector<128x200xf32>
    %24 = arith.mulf %23, %22 : vector<128x200xf32>
    %25 = math.tanh %24 : vector<128x200xf32>
    %cst_22 = arith.constant 5.000000e-01 : f32
    %26 = vector.broadcast %cst_22 : f32 to vector<128x200xf32>
    %27 = arith.mulf %26, %25 : vector<128x200xf32>
    %cst_23 = arith.constant 5.000000e-01 : f32
    %28 = vector.broadcast %cst_23 : f32 to vector<128x200xf32>
    %29 = arith.addf %27, %28 : vector<128x200xf32>
    %30 = arith.mulf %22, %29 : vector<128x200xf32>
    %31 = arith.mulf %30, %30 : vector<128x200xf32>
    %c0_24 = arith.constant 0 : index
    %c0_25 = arith.constant 0 : index
    %32 = vector.load %arg7[%c0_24, %c0_25] : memref<200x640xf32, #tpu.memory_space<vmem>>, vector<200x640xf32>
    %cst_26 = arith.constant dense<0.000000e+00> : vector<128x640xf32>
    %33 = tpu.matmul %31, %32, %cst_26 {dimension_numbers = #tpu.dot_dimension_numbers<[1], [0], [0], [1], [0, 0, 1, 1], [], []>} : vector<128x200xf32>, vector<200x640xf32>, vector<128x640xf32> -> vector<128x640xf32>
    %c0_27 = arith.constant 0 : index
    %c0_28 = arith.constant 0 : index
    %34 = vector.load %arg8[%c0_27, %c0_28] : memref<48x256xf32, #tpu.memory_space<vmem>>, vector<48x256xf32>
    %cst_29 = arith.constant dense<0.000000e+00> : vector<128x256xf32>
    %35 = tpu.matmul %19, %34, %cst_29 {dimension_numbers = #tpu.dot_dimension_numbers<[1], [0], [0], [1], [0, 0, 1, 1], [], []>} : vector<128x48xf32>, vector<48x256xf32>, vector<128x256xf32> -> vector<128x256xf32>
    %36 = vector.extract_strided_slice %35 {offsets = [0, 0], sizes = [128, 128], strides = [1, 1]} : vector<128x256xf32> to vector<128x128xf32>
    %37 = vector.extract_strided_slice %35 {offsets = [0, 128], sizes = [128, 128], strides = [1, 1]} : vector<128x256xf32> to vector<128x128xf32>
    %c0_30 = arith.constant 0 : index
    %c0_31 = arith.constant 0 : index
    %38 = vector.load %arg9[%c0_30, %c0_31] : memref<128x128xf32, #tpu.memory_space<vmem>>, vector<128x128xf32>
    %39 = arith.mulf %36, %36 : vector<128x128xf32>
    %cst_32 = arith.constant dense<0.000000e+00> : vector<128x128xf32>
    %40 = tpu.matmul %39, %38, %cst_32 {dimension_numbers = #tpu.dot_dimension_numbers<[1], [0], [0], [1], [0, 0, 1, 1], [], []>} : vector<128x128xf32>, vector<128x128xf32>, vector<128x128xf32> -> vector<128x128xf32>
    %41 = arith.mulf %36, %37 : vector<128x128xf32>
    %cst_33 = arith.constant dense<0.000000e+00> : vector<128x128xf32>
    %42 = tpu.matmul %41, %38, %cst_33 {dimension_numbers = #tpu.dot_dimension_numbers<[1], [0], [0], [1], [0, 0, 1, 1], [], []>} : vector<128x128xf32>, vector<128x128xf32>, vector<128x128xf32> -> vector<128x128xf32>
    %43 = arith.mulf %37, %37 : vector<128x128xf32>
    %cst_34 = arith.constant dense<0.000000e+00> : vector<128x128xf32>
    %44 = tpu.matmul %43, %38, %cst_34 {dimension_numbers = #tpu.dot_dimension_numbers<[1], [0], [0], [1], [0, 0, 1, 1], [], []>} : vector<128x128xf32>, vector<128x128xf32>, vector<128x128xf32> -> vector<128x128xf32>
    %45 = vector.extract_strided_slice %33 {offsets = [0, 0], sizes = [128, 128], strides = [1, 1]} : vector<128x640xf32> to vector<128x128xf32>
    %46 = vector.extract_strided_slice %33 {offsets = [0, 128], sizes = [128, 128], strides = [1, 1]} : vector<128x640xf32> to vector<128x128xf32>
    %47 = vector.extract_strided_slice %33 {offsets = [0, 256], sizes = [128, 128], strides = [1, 1]} : vector<128x640xf32> to vector<128x128xf32>
    %48 = vector.extract_strided_slice %33 {offsets = [0, 384], sizes = [128, 128], strides = [1, 1]} : vector<128x640xf32> to vector<128x128xf32>
    %49 = vector.extract_strided_slice %33 {offsets = [0, 512], sizes = [128, 128], strides = [1, 1]} : vector<128x640xf32> to vector<128x128xf32>
    %50 = arith.mulf %45, %40 : vector<128x128xf32>
    %51 = arith.addf %46, %47 : vector<128x128xf32>
    %52 = arith.mulf %51, %42 : vector<128x128xf32>
    %53 = arith.addf %50, %52 : vector<128x128xf32>
    %54 = arith.mulf %48, %44 : vector<128x128xf32>
    %55 = arith.addf %53, %54 : vector<128x128xf32>
    %56 = arith.addf %55, %49 : vector<128x128xf32>
    %cst_35 = arith.constant 1.000000e+00 : f32
    %57 = vector.broadcast %cst_35 : f32 to vector<1x128xf32>
    %cst_36 = arith.constant dense<0.000000e+00> : vector<1x128xf32>
    %58 = tpu.matmul %57, %56, %cst_36 {dimension_numbers = #tpu.dot_dimension_numbers<[1], [1], [0], [0], [0, 0, 1, 0], [], []>} : vector<1x128xf32>, vector<128x128xf32>, vector<1x128xf32> -> vector<1x128xf32>
    %c0_37 = arith.constant 0 : index
    %c0_38 = arith.constant 0 : index
    %59 = vector.load %arg12[%c0_37, %c0_38] : memref<1x128xf32, #tpu.memory_space<vmem>>, vector<1x128xf32>
    tpu.vector_store %arg12[%c0_37, %c0_38], %58 {strides = array<i32>} : memref<1x128xf32, #tpu.memory_space<vmem>>, vector<1x128xf32>,
    return
  }
  func.func @transform_0(%arg0: i32) -> (i32, i32) {
    %c0_i32 = arith.constant 0 : i32
    %c0_i32_0 = arith.constant 0 : i32
    return %arg0, %c0_i32 : i32, i32
  }
  func.func @transform_1(%arg0: i32) -> (i32, i32) {
    %c0_i32 = arith.constant 0 : i32
    %c0_i32_0 = arith.constant 0 : i32
    return %arg0, %c0_i32 : i32, i32
  }
  func.func @transform_2(%arg0: i32) -> (i32, i32) {
    %c0_i32 = arith.constant 0 : i32
    %c0_i32_0 = arith.constant 0 : i32
    %c0_i32_1 = arith.constant 0 : i32
    return %c0_i32, %c0_i32_0 : i32, i32
  }
  func.func @transform_3(%arg0: i32) -> (i32, i32) {
    %c0_i32 = arith.constant 0 : i32
    %c0_i32_0 = arith.constant 0 : i32
    %c0_i32_1 = arith.constant 0 : i32
    return %c0_i32, %c0_i32_0 : i32, i32
  }
  func.func @transform_4(%arg0: i32) -> (i32, i32) {
    %c0_i32 = arith.constant 0 : i32
    %c0_i32_0 = arith.constant 0 : i32
    %c0_i32_1 = arith.constant 0 : i32
    return %c0_i32, %c0_i32_0 : i32, i32
  }
  func.func @transform_5(%arg0: i32) -> (i32, i32) {
    %c0_i32 = arith.constant 0 : i32
    %c0_i32_0 = arith.constant 0 : i32
    %c0_i32_1 = arith.constant 0 : i32
    return %c0_i32, %c0_i32_0 : i32, i32
  }
  func.func @transform_6(%arg0: i32) -> (i32, i32) {
    %c0_i32 = arith.constant 0 : i32
    %c0_i32_0 = arith.constant 0 : i32
    %c0_i32_1 = arith.constant 0 : i32
    return %c0_i32, %c0_i32_0 : i32, i32
  }
  func.func @transform_7(%arg0: i32) -> (i32, i32) {
    %c0_i32 = arith.constant 0 : i32
    %c0_i32_0 = arith.constant 0 : i32
    %c0_i32_1 = arith.constant 0 : i32
    return %c0_i32, %c0_i32_0 : i32, i32
  }
  func.func @transform_8(%arg0: i32) -> (i32, i32) {
    %c0_i32 = arith.constant 0 : i32
    %c0_i32_0 = arith.constant 0 : i32
    %c0_i32_1 = arith.constant 0 : i32
    return %c0_i32, %c0_i32_0 : i32, i32
  }
  func.func @transform_9(%arg0: i32) -> (i32, i32) {
    %c0_i32 = arith.constant 0 : i32
    %c0_i32_0 = arith.constant 0 : i32
    return %c0_i32, %arg0 : i32, i32
  }
  func.func @transform_10(%arg0: i32) -> (i32, i32) {
    %c0_i32 = arith.constant 0 : i32
    %c0_i32_0 = arith.constant 0 : i32
    return %c0_i32, %arg0 : i32, i32
  }
  func.func @transform_11(%arg0: i32) -> (i32, i32) {
    %c0_i32 = arith.constant 0 : i32
    %c0_i32_0 = arith.constant 0 : i32
    return %c0_i32, %arg0 : i32, i32
  }
}

</mosaic_0001>

<llo_original>
// kernel: squeeze.2
$region0: #{squeeze.2}
  %s0 = inlined_call_operand.vmem [shape: f32[128], index: 0, kind: input, shape index: {}]
  %s1 = inlined_call_operand.vmem [shape: f32[16,8], index: 1, kind: output, shape index: {}]
  $region1: #{squeeze.2} parent=0
    #allocation0 [shape = 'u8[4096]{0}', space=vmem, size = 0x1000, scoped, tag = 'scoped mem for input reshape']
    %s3 = sshllo.u32 0, 1
    %v4 = vld [vmem:[%s0] sm:%s3]
    %5 = vst [vmem:[#allocation0] sm:%s3] %v4
    %v6 = vld [vmem:[#allocation0] sm:$0x1]
    %vm7 = vcmask 64512
    %8 = vst.msk [vmem:[%s1] sm:$0x1] %vm7, %v6
    %v9 = vld [vmem:[#allocation0] sm:$0x1]
    %10 = vrot.lane.b32.xlu0 %v9, 120
    %v11 = vpop.permute.xlu0 %10
    %vm12 = vcmask 64512
    %s13 = scalar_lea.vmem %s1, 1
    %14 = vst.msk [vmem:[%s13] sm:$0x1] %vm12, %v11
    %v15 = vld [vmem:[#allocation0] sm:$0x1]
    %16 = vrot.lane.b32.xlu0 %v15, 112
    %v17 = vpop.permute.xlu0 %16
    %vm18 = vcmask 64512
    %s19 = scalar_lea.vmem %s1, 2
    %20 = vst.msk [vmem:[%s19] sm:$0x1] %vm18, %v17
    %v21 = vld [vmem:[#allocation0] sm:$0x1]
    %22 = vrot.lane.b32.xlu0 %v21, 104
    %v23 = vpop.permute.xlu0 %22
    %vm24 = vcmask 64512
    %s25 = scalar_lea.vmem %s1, 3
    %26 = vst.msk [vmem:[%s25] sm:$0x1] %vm24, %v23
    %v27 = vld [vmem:[#allocation0] sm:$0x1]
    %28 = vrot.lane.b32.xlu0 %v27, 96
    %v29 = vpop.permute.xlu0 %28
    %vm30 = vcmask 64512
    %s31 = scalar_lea.vmem %s1, 4
    %32 = vst.msk [vmem:[%s31] sm:$0x1] %vm30, %v29
    %v33 = vld [vmem:[#allocation0] sm:$0x1]
    %34 = vrot.lane.b32.xlu0 %v33, 88
    %v35 = vpop.permute.xlu0 %34
    %vm36 = vcmask 64512
    %s37 = scalar_lea.vmem %s1, 5
    %38 = vst.msk [vmem:[%s37] sm:$0x1] %vm36, %v35
    %v39 = vld [vmem:[#allocation0] sm:$0x1]
    %40 = vrot.lane.b32.xlu0 %v39, 80
    %v41 = vpop.permute.xlu0 %40
    %vm42 = vcmask 64512
    %s43 = scalar_lea.vmem %s1, 6
    %44 = vst.msk [vmem:[%s43] sm:$0x1] %vm42, %v41
    %v45 = vld [vmem:[#allocation0] sm:$0x1]
    %46 = vrot.lane.b32.xlu0 %v45, 72
    %v47 = vpop.permute.xlu0 %46
    %vm48 = vcmask 64512
    %s49 = scalar_lea.vmem %s1, 7
    %50 = vst.msk [vmem:[%s49] sm:$0x1] %vm48, %v47
    %v51 = vld [vmem:[#allocation0] sm:$0x1]
    %52 = vrot.lane.b32.xlu0 %v51, 64
    %v53 = vpop.permute.xlu0 %52
    %vm54 = vcmask 64512
    %s55 = scalar_lea.vmem %s1, 8
    %56 = vst.msk [vmem:[%s55] sm:$0x1] %vm54, %v53
    %v57 = vld [vmem:[#allocation0] sm:$0x1]
    %58 = vrot.lane.b32.xlu0 %v57, 56
    %v59 = vpop.permute.xlu0 %58
    %vm60 = vcmask 64512
    %s61 = scalar_lea.vmem %s1, 9
    %62 = vst.msk [vmem:[%s61] sm:$0x1] %vm60, %v59
    %v63 = vld [vmem:[#allocation0] sm:$0x1]
    %64 = vrot.lane.b32.xlu0 %v63, 48
    %v65 = vpop.permute.xlu0 %64
    %vm66 = vcmask 64512
    %s67 = scalar_lea.vmem %s1, 10
    %68 = vst.msk [vmem:[%s67] sm:$0x1] %vm66, %v65
    %v69 = vld [vmem:[#allocation0] sm:$0x1]
    %70 = vrot.lane.b32.xlu0 %v69, 40
    %v71 = vpop.permute.xlu0 %70
    %vm72 = vcmask 64512
    %s73 = scalar_lea.vmem %s1, 11
    %74 = vst.msk [vmem:[%s73] sm:$0x1] %vm72, %v71
    %v75 = vld [vmem:[#allocation0] sm:$0x1]
    %76 = vrot.lane.b32.xlu0 %v75, 32
    %v77 = vpop.permute.xlu0 %76
    %vm78 = vcmask 64512
    %s79 = scalar_lea.vmem %s1, 12
    %80 = vst.msk [vmem:[%s79] sm:$0x1] %vm78, %v77
    %v81 = vld [vmem:[#allocation0] sm:$0x1]
    %82 = vrot.lane.b32.xlu0 %v81, 24
    %v83 = vpop.permute.xlu0 %82
    %vm84 = vcmask 64512
    %s85 = scalar_lea.vmem %s1, 13
    %86 = vst.msk [vmem:[%s85] sm:$0x1] %vm84, %v83
    %v87 = vld [vmem:[#allocation0] sm:$0x1]
    %88 = vrot.lane.b32.xlu0 %v87, 16
    %v89 = vpop.permute.xlu0 %88
    %vm90 = vcmask 64512
    %s91 = scalar_lea.vmem %s1, 14
    %92 = vst.msk [vmem:[%s91] sm:$0x1] %vm90, %v89
    %v93 = vld [vmem:[#allocation0] sm:$0x1]
    %94 = vrot.lane.b32.xlu0 %v93, 8
    %v95 = vpop.permute.xlu0 %94
    %vm96 = vcmask 64512
    %s97 = scalar_lea.vmem %s1, 15
    %98 = vst.msk [vmem:[%s97] sm:$0x1] %vm96, %v95

// kernel: _gnn_fused.1
$region0: #{_gnn_fused.1}
  #allocation0 [shape = 'u32[]', space=smem, size = 0x4, offset = 0x4, fixed_abs, tag = 'smem constant byte address 0x4 - core index']
  #allocation1 [shape = 'u32[144,128]{1,0:T(1,128)}', space=vmem, size = 0x12000, scoped, tag = 'internal scratch']
  %s0 = inlined_call_operand.vmem [shape: f32[128,32], index: 0, kind: input, shape index: {}]
  %s1 = inlined_call_operand.vmem [shape: f32[128,48], index: 1, kind: input, shape index: {}]
  %s2 = inlined_call_operand.vmem [shape: bf16[32,256], index: 2, kind: input, shape index: {}]
  %s3 = inlined_call_operand.vmem [shape: bf16[48,200], index: 3, kind: input, shape index: {}]
  %s4 = inlined_call_operand.vmem [shape: f32[256,32], index: 4, kind: input, shape index: {}]
  %s5 = inlined_call_operand.vmem [shape: f32[1,256], index: 5, kind: input, shape index: {}]
  %s6 = inlined_call_operand.hbm [shape: f32[200,640], index: 6, kind: input, shape index: {}]
  %s7 = inlined_call_operand.vmem [shape: f32[48,256], index: 7, kind: input, shape index: {}]
  %s8 = inlined_call_operand.vmem [shape: f32[128,128], index: 8, kind: input, shape index: {}]
  %s9 = inlined_call_operand.vmem [shape: f32[32,128], index: 9, kind: output, shape index: {0}]
  %s10 = inlined_call_operand.vmem [shape: f32[1,128], index: 10, kind: output, shape index: {1}]
  %s11 = inlined_call_operand.hbm [shape: f32[1,128], index: 11, kind: output, shape index: {2}]
  %12 = xla_tuple %s9, %s10, %s11
  %s13 = sld [smem:[#allocation0]]
  $region66: #{_gnn_fused.1} parent=0
    _
  %s15 = ssub.s32 1, %s13
  %s16 = scalar_select 0, %s15, %s13
  $region1: #{_gnn_fused.1} parent=0
    #allocation2 [shape = 'u8[512000]{0}', space=vmem, size = 0x7d000, scoped, tag = 'input window, operand 6, single buffered']
    #allocation3 [shape = 's32[1]{0}', space=sflag, size = 0x4, scoped, tag = 'scoped memory for _gnn_fused.1']
    #allocation4 [shape = 's32[1]{0}', space=sflag, size = 0x4, scoped, tag = 'scoped memory for _gnn_fused.1']
    #allocation5 [shape = 'u8[512]{0}', space=vmem, size = 0x400, scoped, tag = 'output window, operand 2, single buffered']
    %17 = vsyncpa [#allocation3], 0
    %18 = vsyncpa [#allocation4], 0
    // Predicated region
    $region2: #{_gnn_fused.1} parent=1 // pred_check
      _
    $region3: #{_gnn_fused.1} parent=1 // pred_check_branch
      %20 = sbr.rel (0) target = $region5
    $region4: #{_gnn_fused.1} parent=1 // pred_region
      _
    $region5: #{_gnn_fused.1} parent=1 // pred_fallthru
      _
    // Predicated region
    $region6: #{_gnn_fused.1} parent=1 // pred_check
      _
    $region7: #{_gnn_fused.1} parent=1 // pred_check_branch
      %22 = sbr.rel (0) target = $region9
    $region8: #{_gnn_fused.1} parent=1 // pred_region
      _
    $region9: #{_gnn_fused.1} parent=1 // pred_fallthru
      _
    // Predicated region
    $region10: #{_gnn_fused.1} parent=1 // pred_check
      _
    $region11: #{_gnn_fused.1} parent=1 // pred_check_branch
      %24 = sbr.rel (0) target = $region13
    $region12: #{_gnn_fused.1} parent=1 // pred_region
      _
    $region13: #{_gnn_fused.1} parent=1 // pred_fallthru
      _
    // Predicated region
    $region14: #{_gnn_fused.1} parent=1 // pred_check
      _
    $region15: #{_gnn_fused.1} parent=1 // pred_check_branch
      %26 = sbr.rel (0) target = $region17
    $region16: #{_gnn_fused.1} parent=1 // pred_region
      _
    $region17: #{_gnn_fused.1} parent=1 // pred_fallthru
      _
    // Predicated region
    $region18: #{_gnn_fused.1} parent=1 // pred_check
      _
    $region19: #{_gnn_fused.1} parent=1 // pred_check_branch
      %28 = sbr.rel (0) target = $region21
    $region20: #{_gnn_fused.1} parent=1 // pred_region
      _
    $region21: #{_gnn_fused.1} parent=1 // pred_fallthru
      _
    // Predicated region
    $region22: #{_gnn_fused.1} parent=1 // pred_check
      _
    $region23: #{_gnn_fused.1} parent=1 // pred_check_branch
      %30 = sbr.rel (0) target = $region25
    $region24: #{_gnn_fused.1} parent=1 // pred_region
      _
    $region25: #{_gnn_fused.1} parent=1 // pred_fallthru
      _
    // Predicated region
    $region26: #{_gnn_fused.1} parent=1 // pred_check
      _
    $region27: #{_gnn_fused.1} parent=1 // pred_check_branch
      %32 = sbr.rel (0) target = $region29
    $region28: #{_gnn_fused.1} parent=1 // pred_region
      %s34 = ssub.s32 16000, 16000
      %35 = vsyncadd [#allocation3], %s34
      %s36 = sshll.u32 [#allocation2], 4
      %s37 = int_to_ptr.vmem [resolvable:$true] %s36
      %42 = dma.hbm_to_vmem [thread:$0]  %s6, 16000, %s37, [#allocation3], 640, 640, 40
    $region29: #{_gnn_fused.1} parent=1 // pred_fallthru
      _
    // Predicated region
    $region30: #{_gnn_fused.1} parent=1 // pred_check
      _
    $region31: #{_gnn_fused.1} parent=1 // pred_check_branch
      %44 = sbr.rel (0) target = $region33
    $region32: #{_gnn_fused.1} parent=1 // pred_region
      _
    $region33: #{_gnn_fused.1} parent=1 // pred_fallthru
      _
    // Predicated region
    $region34: #{_gnn_fused.1} parent=1 // pred_check
      _
    $region35: #{_gnn_fused.1} parent=1 // pred_check_branch
      %46 = sbr.rel (0) target = $region37
    $region36: #{_gnn_fused.1} parent=1 // pred_region
      _
    $region37: #{_gnn_fused.1} parent=1 // pred_fallthru
      _
    // Predicated region
    $region38: #{_gnn_fused.1} parent=1 // pred_check
      _
    $region39: #{_gnn_fused.1} parent=1 // pred_check_branch
      %48 = sbr.rel (0) target = $region41
    $region40: #{_gnn_fused.1} parent=1 // pred_region
      %49 = dma.done [#allocation3], 16000
    $region41: #{_gnn_fused.1} parent=1 // pred_fallthru
      _
    %v51 = vld [vmem:[%s0] sm:$0xff]
    %v52 = vld [vmem:[%s0 + $0x8] sm:$0xff]
    %v53 = vld [vmem:[%s0 + $0x10] sm:$0xff]
    %v54 = vld [vmem:[%s0 + $0x18] sm:$0xff]
    %v55 = vld [vmem:[%s0 + $0x20] sm:$0xff]
    %v56 = vld [vmem:[%s0 + $0x28] sm:$0xff]
    %v57 = vld [vmem:[%s0 + $0x30] sm:$0xff]
    %v58 = vld [vmem:[%s0 + $0x38] sm:$0xff]
    %v59 = vld [vmem:[%s0 + $0x40] sm:$0xff]
    %v60 = vld [vmem:[%s0 + $0x48] sm:$0xff]
    %v61 = vld [vmem:[%s0 + $0x50] sm:$0xff]
    %v62 = vld [vmem:[%s0 + $0x58] sm:$0xff]
    %v63 = vld [vmem:[%s0 + $0x60] sm:$0xff]
    %v64 = vld [vmem:[%s0 + $0x68] sm:$0xff]
    %v65 = vld [vmem:[%s0 + $0x70] sm:$0xff]
    %v66 = vld [vmem:[%s0 + $0x78] sm:$0xff]
    %v67 = vpack.c.bf16 %v52, %v51
    %v68 = vpack.c.bf16 %v54, %v53
    %v69 = vpack.c.bf16 %v56, %v55
    %v70 = vpack.c.bf16 %v58, %v57
    %v71 = vpack.c.bf16 %v60, %v59
    %v72 = vpack.c.bf16 %v62, %v61
    %v73 = vpack.c.bf16 %v64, %v63
    %v74 = vpack.c.bf16 %v66, %v65
    %v75 = vld [vmem:[%s2] sm:$0xff]
    %v76 = vld [vmem:[%s2 + $0x8] sm:$0xff]
    %v77 = vld [vmem:[%s2 + $0x10] sm:$0xff]
    %v78 = vld [vmem:[%s2 + $0x18] sm:$0xff]
    %v83 = vunpack.c.l.b16 %v75
    %v84 = vunpack.c.h.b16 %v75
    %v85 = vunpack.c.l.b16 %v76
    %v86 = vunpack.c.h.b16 %v76
    %v87 = vunpack.c.l.b16 %v77
    %v88 = vunpack.c.h.b16 %v77
    %v89 = vunpack.c.l.b16 %v78
    %v90 = vunpack.c.h.b16 %v78
    %v91 = vpack.c.b16 %v85, %v83
    %v92 = vpack.c.b16 %v86, %v84
    %v93 = vpack.c.b16 %v89, %v87
    %v94 = vpack.c.b16 %v90, %v88
    %vm99 = vcmask 261120
    %v101 = vsel %vm99, %v67, 0
    %v104 = vsel %vm99, %v68, 0
    %v107 = vsel %vm99, %v69, 0
    %v110 = vsel %vm99, %v70, 0
    %v113 = vsel %vm99, %v71, 0
    %v116 = vsel %vm99, %v72, 0
    %v119 = vsel %vm99, %v73, 0
    %v122 = vsel %vm99, %v74, 0
    %124 = vmatprep.subr.bf16.mxu0 %v92
    %125 = vmatpush1.bf16.msra.mxu0 %v91
    %126 = vmatprep.subr.bf16.mxu0 %v94
    %127 = vmatpush1.bf16.msra.mxu0 %v93
    %128 = vmatprep.subr.bf16.mxu0 0
    %129 = vmatpush1.bf16.msra.mxu0 0
    %130 = vmatprep.subr.bf16.mxu0 0
    %131 = vmatpush1.bf16.msra.mxu0 0
    %132 = vmatprep.subr.bf16.mxu0 0
    %133 = vmatpush1.bf16.msra.mxu0 0
    %134 = vmatprep.subr.bf16.mxu0 0
    %135 = vmatpush1.bf16.msra.mxu0 0
    %136 = vmatprep.subr.bf16.mxu0 0
    %137 = vmatpush1.bf16.msra.mxu0 0
    %138 = vmatprep.subr.bf16.mxu0 0
    %139 = vmatpush1.bf16.msra.mxu0 0
    %140 = vmatprep.subr.bf16.mxu0 0
    %141 = vmatpush1.bf16.msra.mxu0 0
    %142 = vmatprep.subr.bf16.mxu0 0
    %143 = vmatpush1.bf16.msra.mxu0 0
    %144 = vmatprep.subr.bf16.mxu0 0
    %145 = vmatpush1.bf16.msra.mxu0 0
    %146 = vmatprep.subr.bf16.mxu0 0
    %147 = vmatpush1.bf16.msra.mxu0 0
    %148 = vmatprep.subr.bf16.mxu0 0
    %149 = vmatpush1.bf16.msra.mxu0 0
    %150 = vmatprep.subr.bf16.mxu0 0
    %151 = vmatpush1.bf16.msra.mxu0 0
    %152 = vmatprep.subr.bf16.mxu0 0
    %153 = vmatpush1.bf16.msra.mxu0 0
    %154 = vmatprep.subr.bf16.mxu0 0
    %155 = vmatpush1.bf16.msra.mxu0 0
    %156 = vmatprep.mubr.bf16.mxu0 0
    %157 = vmatmul.mubr.bf16.gmra.mrb[0].mxu0 %v101
    %v158 = vpop.f32.mrb[0].mxu0
    %v159 = vadd.f32 0.0, %v158
    %v160 = vpop.f32.mrb[0].mxu0
    %v161 = vadd.f32 0.0, %v160
    %v162 = vpop.f32.mrb[0].mxu0
    %v163 = vadd.f32 0.0, %v162
    %v164 = vpop.f32.mrb[0].mxu0
    %v165 = vadd.f32 0.0, %v164
    %166 = vmatprep.mubr.bf16.mxu0 0
    %167 = vmatmul.mubr.bf16.gmra.mrb[0].mxu0 %v104
    %v168 = vpop.f32.mrb[0].mxu0
    %v169 = vadd.f32 0.0, %v168
    %v170 = vpop.f32.mrb[0].mxu0
    %v171 = vadd.f32 0.0, %v170
    %v172 = vpop.f32.mrb[0].mxu0
    %v173 = vadd.f32 0.0, %v172
    %v174 = vpop.f32.mrb[0].mxu0
    %v175 = vadd.f32 0.0, %v174
    %176 = vmatprep.mubr.bf16.mxu0 0
    %177 = vmatmul.mubr.bf16.gmra.mrb[0].mxu0 %v107
    %v178 = vpop.f32.mrb[0].mxu0
    %v179 = vadd.f32 0.0, %v178
    %v180 = vpop.f32.mrb[0].mxu0
    %v181 = vadd.f32 0.0, %v180
    %v182 = vpop.f32.mrb[0].mxu0
    %v183 = vadd.f32 0.0, %v182
    %v184 = vpop.f32.mrb[0].mxu0
    %v185 = vadd.f32 0.0, %v184
    %186 = vmatprep.mubr.bf16.mxu0 0
    %187 = vmatmul.mubr.bf16.gmra.mrb[0].mxu0 %v110
    %v188 = vpop.f32.mrb[0].mxu0
    %v189 = vadd.f32 0.0, %v188
    %v190 = vpop.f32.mrb[0].mxu0
    %v191 = vadd.f32 0.0, %v190
    %v192 = vpop.f32.mrb[0].mxu0
    %v193 = vadd.f32 0.0, %v192
    %v194 = vpop.f32.mrb[0].mxu0
    %v195 = vadd.f32 0.0, %v194
    %196 = vmatprep.mubr.bf16.mxu0 0
    %197 = vmatmul.mubr.bf16.gmra.mrb[0].mxu0 %v113
    %v198 = vpop.f32.mrb[0].mxu0
    %v199 = vadd.f32 0.0, %v198
    %v200 = vpop.f32.mrb[0].mxu0
    %v201 = vadd.f32 0.0, %v200
    %v202 = vpop.f32.mrb[0].mxu0
    %v203 = vadd.f32 0.0, %v202
    %v204 = vpop.f32.mrb[0].mxu0
    %v205 = vadd.f32 0.0, %v204
    %206 = vmatprep.mubr.bf16.mxu0 0
    %207 = vmatmul.mubr.bf16.gmra.mrb[0].mxu0 %v116
    %v208 = vpop.f32.mrb[0].mxu0
    %v209 = vadd.f32 0.0, %v208
    %v210 = vpop.f32.mrb[0].mxu0
    %v211 = vadd.f32 0.0, %v210
    %v212 = vpop.f32.mrb[0].mxu0
    %v213 = vadd.f32 0.0, %v212
    %v214 = vpop.f32.mrb[0].mxu0
    %v215 = vadd.f32 0.0, %v214
    %216 = vmatprep.mubr.bf16.mxu0 0
    %217 = vmatmul.mubr.bf16.gmra.mrb[0].mxu0 %v119
    %v218 = vpop.f32.mrb[0].mxu0
    %v219 = vadd.f32 0.0, %v218
    %v220 = vpop.f32.mrb[0].mxu0
    %v221 = vadd.f32 0.0, %v220
    %v222 = vpop.f32.mrb[0].mxu0
    %v223 = vadd.f32 0.0, %v222
    %v224 = vpop.f32.mrb[0].mxu0
    %v225 = vadd.f32 0.0, %v224
    %226 = vmatprep.mubr.bf16.mxu0 0
    %227 = vmatmul.mubr.bf16.gmra.mrb[0].mxu0 %v122
    %v228 = vpop.f32.mrb[0].mxu0
    %v229 = vadd.f32 0.0, %v228
    %v230 = vpop.f32.mrb[0].mxu0
    %v231 = vadd.f32 0.0, %v230
    %v232 = vpop.f32.mrb[0].mxu0
    %v233 = vadd.f32 0.0, %v232
    %v234 = vpop.f32.mrb[0].mxu0
    %v235 = vadd.f32 0.0, %v234
    %236 = vdwg.mxu0
    %v237 = vmul.f32 %v159, 0.5
    %v238 = vmul.f32 %v161, 0.5
    %v239 = vmul.f32 %v163, 0.5
    %v240 = vmul.f32 %v165, 0.5
    %v241 = vmul.f32 %v169, 0.5
    %v242 = vmul.f32 %v171, 0.5
    %v243 = vmul.f32 %v173, 0.5
    %v244 = vmul.f32 %v175, 0.5
    %v245 = vmul.f32 %v179, 0.5
    %v246 = vmul.f32 %v181, 0.5
    %v247 = vmul.f32 %v183, 0.5
    %v248 = vmul.f32 %v185, 0.5
    %v249 = vmul.f32 %v189, 0.5
    %v250 = vmul.f32 %v191, 0.5
    %v251 = vmul.f32 %v193, 0.5
    %v252 = vmul.f32 %v195, 0.5
    %v253 = vmul.f32 %v199, 0.5
    %v254 = vmul.f32 %v201, 0.5
    %v255 = vmul.f32 %v203, 0.5
    %v256 = vmul.f32 %v205, 0.5
    %v257 = vmul.f32 %v209, 0.5
    %v258 = vmul.f32 %v211, 0.5
    %v259 = vmul.f32 %v213, 0.5
    %v260 = vmul.f32 %v215, 0.5
    %v261 = vmul.f32 %v219, 0.5
    %v262 = vmul.f32 %v221, 0.5
    %v263 = vmul.f32 %v223, 0.5
    %v264 = vmul.f32 %v225, 0.5
    %v265 = vmul.f32 %v229, 0.5
    %v266 = vmul.f32 %v231, 0.5
    %v267 = vmul.f32 %v233, 0.5
    %v268 = vmul.f32 %v235, 0.5
    %v269 = vtanh.pop %v237
    %v270 = vtanh.pop %v238
    %v271 = vtanh.pop %v239
    %v272 = vtanh.pop %v240
    %v273 = vtanh.pop %v241
    %v274 = vtanh.pop %v242
    %v275 = vtanh.pop %v243
    %v276 = vtanh.pop %v244
    %v277 = vtanh.pop %v245
    %v278 = vtanh.pop %v246
    %v279 = vtanh.pop %v247
    %v280 = vtanh.pop %v248
    %v281 = vtanh.pop %v249
    %v282 = vtanh.pop %v250
    %v283 = vtanh.pop %v251
    %v284 = vtanh.pop %v252
    %v285 = vtanh.pop %v253
    %v286 = vtanh.pop %v254
    %v287 = vtanh.pop %v255
    %v288 = vtanh.pop %v256
    %v289 = vtanh.pop %v257
    %v290 = vtanh.pop %v258
    %v291 = vtanh.pop %v259
    %v292 = vtanh.pop %v260
    %v293 = vtanh.pop %v261
    %v294 = vtanh.pop %v262
    %v295 = vtanh.pop %v263
    %v296 = vtanh.pop %v264
    %v297 = vtanh.pop %v265
    %v298 = vtanh.pop %v266
    %v299 = vtanh.pop %v267
    %v300 = vtanh.pop %v268
    %v301 = vmul.f32 %v269, 0.5
    %v302 = vmul.f32 %v270, 0.5
    %v303 = vmul.f32 %v271, 0.5
    %v304 = vmul.f32 %v272, 0.5
    %v305 = vmul.f32 %v273, 0.5
    %v306 = vmul.f32 %v274, 0.5
    %v307 = vmul.f32 %v275, 0.5
    %v308 = vmul.f32 %v276, 0.5
    %v309 = vmul.f32 %v277, 0.5
    %v310 = vmul.f32 %v278, 0.5
    %v311 = vmul.f32 %v279, 0.5
    %v312 = vmul.f32 %v280, 0.5
    %v313 = vmul.f32 %v281, 0.5
    %v314 = vmul.f32 %v282, 0.5
    %v315 = vmul.f32 %v283, 0.5
    %v316 = vmul.f32 %v284, 0.5
    %v317 = vmul.f32 %v285, 0.5
    %v318 = vmul.f32 %v286, 0.5
    %v319 = vmul.f32 %v287, 0.5
    %v320 = vmul.f32 %v288, 0.5
    %v321 = vmul.f32 %v289, 0.5
    %v322 = vmul.f32 %v290, 0.5
    %v323 = vmul.f32 %v291, 0.5
    %v324 = vmul.f32 %v292, 0.5
    %v325 = vmul.f32 %v293, 0.5
    %v326 = vmul.f32 %v294, 0.5
    %v327 = vmul.f32 %v295, 0.5
    %v328 = vmul.f32 %v296, 0.5
    %v329 = vmul.f32 %v297, 0.5
    %v330 = vmul.f32 %v298, 0.5
    %v331 = vmul.f32 %v299, 0.5
    %v332 = vmul.f32 %v300, 0.5
    %v333 = vadd.f32 %v301, 0.5
    %v334 = vadd.f32 %v302, 0.5
    %v335 = vadd.f32 %v303, 0.5
    %v336 = vadd.f32 %v304, 0.5
    %v337 = vadd.f32 %v305, 0.5
    %v338 = vadd.f32 %v306, 0.5
    %v339 = vadd.f32 %v307, 0.5
    %v340 = vadd.f32 %v308, 0.5
    %v341 = vadd.f32 %v309, 0.5
    %v342 = vadd.f32 %v310, 0.5
    %v343 = vadd.f32 %v311, 0.5
    %v344 = vadd.f32 %v312, 0.5
    %v345 = vadd.f32 %v313, 0.5
    %v346 = vadd.f32 %v314, 0.5
    %v347 = vadd.f32 %v315, 0.5
    %v348 = vadd.f32 %v316, 0.5
    %v349 = vadd.f32 %v317, 0.5
    %v350 = vadd.f32 %v318, 0.5
    %v351 = vadd.f32 %v319, 0.5
    %v352 = vadd.f32 %v320, 0.5
    %v353 = vadd.f32 %v321, 0.5
    %v354 = vadd.f32 %v322, 0.5
    %v355 = vadd.f32 %v323, 0.5
    %v356 = vadd.f32 %v324, 0.5
    %v357 = vadd.f32 %v325, 0.5
    %v358 = vadd.f32 %v326, 0.5
    %v359 = vadd.f32 %v327, 0.5
    %v360 = vadd.f32 %v328, 0.5
    %v361 = vadd.f32 %v329, 0.5
    %v362 = vadd.f32 %v330, 0.5
    %v363 = vadd.f32 %v331, 0.5
    %v364 = vadd.f32 %v332, 0.5
    %v365 = vmul.f32 %v159, %v333
    %v366 = vmul.f32 %v161, %v334
    %v367 = vmul.f32 %v163, %v335
    %v368 = vmul.f32 %v165, %v336
    %v369 = vmul.f32 %v169, %v337
    %v370 = vmul.f32 %v171, %v338
    %v371 = vmul.f32 %v173, %v339
    %v372 = vmul.f32 %v175, %v340
    %v373 = vmul.f32 %v179, %v341
    %v374 = vmul.f32 %v181, %v342
    %v375 = vmul.f32 %v183, %v343
    %v376 = vmul.f32 %v185, %v344
    %v377 = vmul.f32 %v189, %v345
    %v378 = vmul.f32 %v191, %v346
    %v379 = vmul.f32 %v193, %v347
    %v380 = vmul.f32 %v195, %v348
    %v381 = vmul.f32 %v199, %v349
    %v382 = vmul.f32 %v201, %v350
    %v383 = vmul.f32 %v203, %v351
    %v384 = vmul.f32 %v205, %v352
    %v385 = vmul.f32 %v209, %v353
    %v386 = vmul.f32 %v211, %v354
    %v387 = vmul.f32 %v213, %v355
    %v388 = vmul.f32 %v215, %v356
    %v389 = vmul.f32 %v219, %v357
    %v390 = vmul.f32 %v221, %v358
    %v391 = vmul.f32 %v223, %v359
    %v392 = vmul.f32 %v225, %v360
    %v393 = vmul.f32 %v229, %v361
    %v394 = vmul.f32 %v231, %v362
    %v395 = vmul.f32 %v233, %v363
    %v396 = vmul.f32 %v235, %v364
    %v397 = vld [vmem:[%s4] sm:$0xff]
    %v398 = vld [vmem:[%s4 + $0x8] sm:$0xff]
    %v399 = vld [vmem:[%s4 + $0x10] sm:$0xff]
    %v400 = vld [vmem:[%s4 + $0x18] sm:$0xff]
    %v401 = vld [vmem:[%s4 + $0x20] sm:$0xff]
    %v402 = vld [vmem:[%s4 + $0x28] sm:$0xff]
    %v403 = vld [vmem:[%s4 + $0x30] sm:$0xff]
    %v404 = vld [vmem:[%s4 + $0x38] sm:$0xff]
    %v405 = vld [vmem:[%s4 + $0x40] sm:$0xff]
    %v406 = vld [vmem:[%s4 + $0x48] sm:$0xff]
    %v407 = vld [vmem:[%s4 + $0x50] sm:$0xff]
    %v408 = vld [vmem:[%s4 + $0x58] sm:$0xff]
    %v409 = vld [vmem:[%s4 + $0x60] sm:$0xff]
    %v410 = vld [vmem:[%s4 + $0x68] sm:$0xff]
    %v411 = vld [vmem:[%s4 + $0x70] sm:$0xff]
    %v412 = vld [vmem:[%s4 + $0x78] sm:$0xff]
    %v413 = vld [vmem:[%s4 + $0x80] sm:$0xff]
    %v414 = vld [vmem:[%s4 + $0x88] sm:$0xff]
    %v415 = vld [vmem:[%s4 + $0x90] sm:$0xff]
    %v416 = vld [vmem:[%s4 + $0x98] sm:$0xff]
    %v417 = vld [vmem:[%s4 + $0xa0] sm:$0xff]
    %v418 = vld [vmem:[%s4 + $0xa8] sm:$0xff]
    %v419 = vld [vmem:[%s4 + $0xb0] sm:$0xff]
    %v420 = vld [vmem:[%s4 + $0xb8] sm:$0xff]
    %v421 = vld [vmem:[%s4 + $0xc0] sm:$0xff]
    %v422 = vld [vmem:[%s4 + $0xc8] sm:$0xff]
    %v423 = vld [vmem:[%s4 + $0xd0] sm:$0xff]
    %v424 = vld [vmem:[%s4 + $0xd8] sm:$0xff]
    %v425 = vld [vmem:[%s4 + $0xe0] sm:$0xff]
    %v426 = vld [vmem:[%s4 + $0xe8] sm:$0xff]
    %v427 = vld [vmem:[%s4 + $0xf0] sm:$0xff]
    %v428 = vld [vmem:[%s4 + $0xf8] sm:$0xff]
    %429 = vxpose.xlu0.b32.start [1/16] %v397, 128
    %430 = vxpose.xlu0.b32.cont [2/16] %v398, 128
    %431 = vxpose.xlu0.b32.cont [3/16] %v399, 128
    %432 = vxpose.xlu0.b32.cont [4/16] %v400, 128
    %433 = vxpose.xlu0.b32.cont [5/16] %v401, 128
    %434 = vxpose.xlu0.b32.cont [6/16] %v402, 128
    %435 = vxpose.xlu0.b32.cont [7/16] %v403, 128
    %436 = vxpose.xlu0.b32.cont [8/16] %v404, 128
    %437 = vxpose.xlu0.b32.cont [9/16] %v405, 128
    %438 = vxpose.xlu0.b32.cont [10/16] %v406, 128
    %439 = vxpose.xlu0.b32.cont [11/16] %v407, 128
    %440 = vxpose.xlu0.b32.cont [12/16] %v408, 128
    %441 = vxpose.xlu0.b32.cont [13/16] %v409, 128
    %442 = vxpose.xlu0.b32.cont [14/16] %v410, 128
    %443 = vxpose.xlu0.b32.cont [15/16] %v411, 128
    %444 = vxpose.xlu0.b32.end [16/16] %v412, 128
    %v445 = vpop.trf.xlu0
    %v446 = vpop.trf.xlu0
    %v447 = vpop.trf.xlu0
    %v448 = vpop.trf.xlu0
    %v449 = vpop.trf.xlu0
    %v450 = vpop.trf.xlu0
    %v451 = vpop.trf.xlu0
    %v452 = vpop.trf.xlu0
    %v453 = vpop.trf.xlu0
    %v454 = vpop.trf.xlu0
    %v455 = vpop.trf.xlu0
    %v456 = vpop.trf.xlu0
    %v457 = vpop.trf.xlu0
    %v458 = vpop.trf.xlu0
    %v459 = vpop.trf.xlu0
    %v460 = vpop.trf.xlu0
    %461 = vxpose.xlu0.b32.start [1/16] %v413, 128
    %462 = vxpose.xlu0.b32.cont [2/16] %v414, 128
    %463 = vxpose.xlu0.b32.cont [3/16] %v415, 128
    %464 = vxpose.xlu0.b32.cont [4/16] %v416, 128
    %465 = vxpose.xlu0.b32.cont [5/16] %v417, 128
    %466 = vxpose.xlu0.b32.cont [6/16] %v418, 128
    %467 = vxpose.xlu0.b32.cont [7/16] %v419, 128
    %468 = vxpose.xlu0.b32.cont [8/16] %v420, 128
    %469 = vxpose.xlu0.b32.cont [9/16] %v421, 128
    %470 = vxpose.xlu0.b32.cont [10/16] %v422, 128
    %471 = vxpose.xlu0.b32.cont [11/16] %v423, 128
    %472 = vxpose.xlu0.b32.cont [12/16] %v424, 128
    %473 = vxpose.xlu0.b32.cont [13/16] %v425, 128
    %474 = vxpose.xlu0.b32.cont [14/16] %v426, 128
    %475 = vxpose.xlu0.b32.cont [15/16] %v427, 128
    %476 = vxpose.xlu0.b32.end [16/16] %v428, 128
    %v477 = vpop.trf.xlu0
    %v478 = vpop.trf.xlu0
    %v479 = vpop.trf.xlu0
    %v480 = vpop.trf.xlu0
    %v481 = vpop.trf.xlu0
    %v482 = vpop.trf.xlu0
    %v483 = vpop.trf.xlu0
    %v484 = vpop.trf.xlu0
    %v485 = vpop.trf.xlu0
    %v486 = vpop.trf.xlu0
    %v487 = vpop.trf.xlu0
    %v488 = vpop.trf.xlu0
    %v489 = vpop.trf.xlu0
    %v490 = vpop.trf.xlu0
    %v491 = vpop.trf.xlu0
    %v492 = vpop.trf.xlu0
    %493 = vmatprep.subr.mxu0 %v366
    %494 = vmatpush1.xpose.msra.mxu0 %v365
    %495 = vmatprep.subr.mxu0 %v368
    %496 = vmatpush1.xpose.msra.mxu0 %v367
    %497 = vmatprep.subr.mxu0 %v370
    %498 = vmatpush1.xpose.msra.mxu0 %v369
    %499 = vmatprep.subr.mxu0 %v372
    %500 = vmatpush1.xpose.msra.mxu0 %v371
    %501 = vmatprep.subr.mxu0 %v374
    %502 = vmatpush1.xpose.msra.mxu0 %v373
    %503 = vmatprep.subr.mxu0 %v376
    %504 = vmatpush1.xpose.msra.mxu0 %v375
    %505 = vmatprep.subr.mxu0 %v378
    %506 = vmatpush1.xpose.msra.mxu0 %v377
    %507 = vmatprep.subr.mxu0 %v380
    %508 = vmatpush1.xpose.msra.mxu0 %v379
    %509 = vmatprep.subr.mxu0 %v382
    %510 = vmatpush1.xpose.msra.mxu0 %v381
    %511 = vmatprep.subr.mxu0 %v384
    %512 = vmatpush1.xpose.msra.mxu0 %v383
    %513 = vmatprep.subr.mxu0 %v386
    %514 = vmatpush1.xpose.msra.mxu0 %v385
    %515 = vmatprep.subr.mxu0 %v388
    %516 = vmatpush1.xpose.msra.mxu0 %v387
    %517 = vmatprep.subr.mxu0 %v390
    %518 = vmatpush1.xpose.msra.mxu0 %v389
    %519 = vmatprep.subr.mxu0 %v392
    %520 = vmatpush1.xpose.msra.mxu0 %v391
    %521 = vmatprep.subr.mxu0 %v394
    %522 = vmatpush1.xpose.msra.mxu0 %v393
    %523 = vmatprep.subr.mxu0 %v396
    %524 = vmatpush1.xpose.msra.mxu0 %v395
    %525 = vmatprep.subr.mxu0 0.0
    %526 = vmatpush1.xpose.msra.mxu0 0.0
    %527 = vmatprep.subr.mxu0 0.0
    %528 = vmatpush1.xpose.msra.mxu0 0.0
    %529 = vmatprep.subr.mxu0 0.0
    %530 = vmatpush1.xpose.msra.mxu0 0.0
    %531 = vmatprep.subr.mxu0 0.0
    %532 = vmatpush1.xpose.msra.mxu0 0.0
    %533 = vmatprep.subr.mxu0 0.0
    %534 = vmatpush1.xpose.msra.mxu0 0.0
    %535 = vmatprep.subr.mxu0 0.0
    %536 = vmatpush1.xpose.msra.mxu0 0.0
    %537 = vmatprep.subr.mxu0 0.0
    %538 = vmatpush1.xpose.msra.mxu0 0.0
    %539 = vmatprep.subr.mxu0 0.0
    %540 = vmatpush1.xpose.msra.mxu0 0.0
    %541 = vmatprep.subr.mxu0 0.0
    %542 = vmatpush1.xpose.msra.mxu0 0.0
    %543 = vmatprep.subr.mxu0 0.0
    %544 = vmatpush1.xpose.msra.mxu0 0.0
    %545 = vmatprep.subr.mxu0 0.0
    %546 = vmatpush1.xpose.msra.mxu0 0.0
    %547 = vmatprep.subr.mxu0 0.0
    %548 = vmatpush1.xpose.msra.mxu0 0.0
    %549 = vmatprep.subr.mxu0 0.0
    %550 = vmatpush1.xpose.msra.mxu0 0.0
    %551 = vmatprep.subr.mxu0 0.0
    %552 = vmatpush1.xpose.msra.mxu0 0.0
    %553 = vmatprep.subr.mxu0 0.0
    %554 = vmatpush1.xpose.msra.mxu0 0.0
    %555 = vmatprep.subr.mxu0 0.0
    %556 = vmatpush1.xpose.msra.mxu0 0.0
    %557 = vmatprep.mubr.f32.mxu0 %v477
    %558 = vmatmul.mubr.f32.gmra.mrb[0].mxu0 %v445
    %v559 = vpop.f32.mrb[0].mxu0
    %v560 = vadd.f32 0.0, %v559
    %v561 = vpop.f32.mrb[0].mxu0
    %562 = vmatprep.mubr.f32.mxu0 %v478
    %563 = vmatmul.mubr.f32.gmra.mrb[0].mxu0 %v446
    %v564 = vpop.f32.mrb[0].mxu0
    %v565 = vadd.f32 0.0, %v564
    %v566 = vpop.f32.mrb[0].mxu0
    %567 = vmatprep.mubr.f32.mxu0 %v479
    %568 = vmatmul.mubr.f32.gmra.mrb[0].mxu0 %v447
    %v569 = vpop.f32.mrb[0].mxu0
    %v570 = vadd.f32 0.0, %v569
    %v571 = vpop.f32.mrb[0].mxu0
    %572 = vmatprep.mubr.f32.mxu0 %v480
    %573 = vmatmul.mubr.f32.gmra.mrb[0].mxu0 %v448
    %v574 = vpop.f32.mrb[0].mxu0
    %v575 = vadd.f32 0.0, %v574
    %v576 = vpop.f32.mrb[0].mxu0
    %577 = vdwg.mxu0
    %v578 = vmul.f32 %v560, %v560
    %v579 = vmul.f32 %v565, %v565
    %v580 = vmul.f32 %v570, %v570
    %v581 = vmul.f32 %v575, %v575
    %582 = vst [vmem:[%s9] sm:$0xff] %v578
    %583 = vst [vmem:[%s9 + $0x8] sm:$0xff] %v579
    %584 = vst [vmem:[%s9 + $0x10] sm:$0xff] %v580
    %585 = vst [vmem:[%s9 + $0x18] sm:$0xff] %v581
    %v586 = vld [vmem:[%s5] sm:$0x3]
    %v588 = vlaneseq
    %v589 = vshrl.u32 %v588, 7
    %v590 = vsub.s32 0, %v589
    %v591 = vrot.slane %v586, %v590
    %v592 = vlaneseq
    %v593 = vshrl.u32 %v592, 7
    %v594 = vsub.s32 1, %v593
    %v595 = vrot.slane %v586, %v594
    %598 = vmatprep.subr.mxu0 %v366
    %599 = vmatpush1.xpose.msra.mxu0 %v365
    %600 = vmatprep.subr.mxu0 %v368
    %601 = vmatpush1.xpose.msra.mxu0 %v367
    %602 = vmatprep.subr.mxu0 %v370
    %603 = vmatpush1.xpose.msra.mxu0 %v369
    %604 = vmatprep.subr.mxu0 %v372
    %605 = vmatpush1.xpose.msra.mxu0 %v371
    %606 = vmatprep.subr.mxu0 %v374
    %607 = vmatpush1.xpose.msra.mxu0 %v373
    %608 = vmatprep.subr.mxu0 %v376
    %609 = vmatpush1.xpose.msra.mxu0 %v375
    %610 = vmatprep.subr.mxu0 %v378
    %611 = vmatpush1.xpose.msra.mxu0 %v377
    %612 = vmatprep.subr.mxu0 %v380
    %613 = vmatpush1.xpose.msra.mxu0 %v379
    %614 = vmatprep.subr.mxu0 %v382
    %615 = vmatpush1.xpose.msra.mxu0 %v381
    %616 = vmatprep.subr.mxu0 %v384
    %617 = vmatpush1.xpose.msra.mxu0 %v383
    %618 = vmatprep.subr.mxu0 %v386
    %619 = vmatpush1.xpose.msra.mxu0 %v385
    %620 = vmatprep.subr.mxu0 %v388
    %621 = vmatpush1.xpose.msra.mxu0 %v387
    %622 = vmatprep.subr.mxu0 %v390
    %623 = vmatpush1.xpose.msra.mxu0 %v389
    %624 = vmatprep.subr.mxu0 %v392
    %625 = vmatpush1.xpose.msra.mxu0 %v391
    %626 = vmatprep.subr.mxu0 %v394
    %627 = vmatpush1.xpose.msra.mxu0 %v393
    %628 = vmatprep.subr.mxu0 %v396
    %629 = vmatpush1.xpose.msra.mxu0 %v395
    %630 = vmatprep.subr.mxu0 0.0
    %631 = vmatpush1.xpose.msra.mxu0 0.0
    %632 = vmatprep.subr.mxu0 0.0
    %633 = vmatpush1.xpose.msra.mxu0 0.0
    %634 = vmatprep.subr.mxu0 0.0
    %635 = vmatpush1.xpose.msra.mxu0 0.0
    %636 = vmatprep.subr.mxu0 0.0
    %637 = vmatpush1.xpose.msra.mxu0 0.0
    %638 = vmatprep.subr.mxu0 0.0
    %639 = vmatpush1.xpose.msra.mxu0 0.0
    %640 = vmatprep.subr.mxu0 0.0
    %641 = vmatpush1.xpose.msra.mxu0 0.0
    %642 = vmatprep.subr.mxu0 0.0
    %643 = vmatpush1.xpose.msra.mxu0 0.0
    %644 = vmatprep.subr.mxu0 0.0
    %645 = vmatpush1.xpose.msra.mxu0 0.0
    %646 = vmatprep.subr.mxu0 0.0
    %647 = vmatpush1.xpose.msra.mxu0 0.0
    %648 = vmatprep.subr.mxu0 0.0
    %649 = vmatpush1.xpose.msra.mxu0 0.0
    %650 = vmatprep.subr.mxu0 0.0
    %651 = vmatpush1.xpose.msra.mxu0 0.0
    %652 = vmatprep.subr.mxu0 0.0
    %653 = vmatpush1.xpose.msra.mxu0 0.0
    %654 = vmatprep.subr.mxu0 0.0
    %655 = vmatpush1.xpose.msra.mxu0 0.0
    %656 = vmatprep.subr.mxu0 0.0
    %657 = vmatpush1.xpose.msra.mxu0 0.0
    %658 = vmatprep.subr.mxu0 0.0
    %659 = vmatpush1.xpose.msra.mxu0 0.0
    %660 = vmatprep.subr.mxu0 0.0
    %661 = vmatpush1.xpose.msra.mxu0 0.0
    %662 = vmatprep.mubr.f32.mxu0 %v595
    %663 = vmatmul.mubr.f32.gmra.mrb[0].mxu0 %v591
    %v664 = vpop.f32.mrb[0].mxu0
    %v665 = vadd.f32 0.0, %v664
    %v666 = vpop.f32.mrb[0].mxu0
    %667 = vdwg.mxu0
    %668 = vst [vmem:[%s10] sm:$0x1] %v665
    %v669 = vld [vmem:[%s1] sm:$0xff]
    %v670 = vld [vmem:[%s1 + $0x8] sm:$0xff]
    %v671 = vld [vmem:[%s1 + $0x10] sm:$0xff]
    %v672 = vld [vmem:[%s1 + $0x18] sm:$0xff]
    %v673 = vld [vmem:[%s1 + $0x20] sm:$0xff]
    %v674 = vld [vmem:[%s1 + $0x28] sm:$0xff]
    %v675 = vld [vmem:[%s1 + $0x30] sm:$0xff]
    %v676 = vld [vmem:[%s1 + $0x38] sm:$0xff]
    %v677 = vld [vmem:[%s1 + $0x40] sm:$0xff]
    %v678 = vld [vmem:[%s1 + $0x48] sm:$0xff]
    %v679 = vld [vmem:[%s1 + $0x50] sm:$0xff]
    %v680 = vld [vmem:[%s1 + $0x58] sm:$0xff]
    %v681 = vld [vmem:[%s1 + $0x60] sm:$0xff]
    %v682 = vld [vmem:[%s1 + $0x68] sm:$0xff]
    %v683 = vld [vmem:[%s1 + $0x70] sm:$0xff]
    %v684 = vld [vmem:[%s1 + $0x78] sm:$0xff]
    %v685 = vpack.c.bf16 %v670, %v669
    %v686 = vpack.c.bf16 %v672, %v671
    %v687 = vpack.c.bf16 %v674, %v673
    %v688 = vpack.c.bf16 %v676, %v675
    %v689 = vpack.c.bf16 %v678, %v677
    %v690 = vpack.c.bf16 %v680, %v679
    %v691 = vpack.c.bf16 %v682, %v681
    %v692 = vpack.c.bf16 %v684, %v683
    %v693 = vld [vmem:[%s3] sm:$0xff]
    %v694 = vld [vmem:[%s3 + $0x8] sm:$0xff]
    %v695 = vld [vmem:[%s3 + $0x10] sm:$0xff]
    %v696 = vld [vmem:[%s3 + $0x18] sm:$0xff]
    %v697 = vld [vmem:[%s3 + $0x20] sm:$0xff]
    %v698 = vld [vmem:[%s3 + $0x28] sm:$0xff]
    %v705 = vunpack.c.l.b16 %v693
    %v706 = vunpack.c.h.b16 %v693
    %v707 = vunpack.c.l.b16 %v694
    %v708 = vunpack.c.h.b16 %v694
    %v709 = vunpack.c.l.b16 %v695
    %v710 = vunpack.c.h.b16 %v695
    %v711 = vunpack.c.l.b16 %v696
    %v712 = vunpack.c.h.b16 %v696
    %v713 = vunpack.c.l.b16 %v697
    %v714 = vunpack.c.h.b16 %v697
    %v715 = vunpack.c.l.b16 %v698
    %v716 = vunpack.c.h.b16 %v698
    %v717 = vpack.c.b16 %v707, %v705
    %v718 = vpack.c.b16 %v708, %v706
    %v719 = vpack.c.b16 %v711, %v709
    %v720 = vpack.c.b16 %v712, %v710
    %v721 = vpack.c.b16 %v715, %v713
    %v722 = vpack.c.b16 %v716, %v714
    %vm729 = vcmask 392192
    %v731 = vsel %vm729, %v685, 0
    %v734 = vsel %vm729, %v686, 0
    %v737 = vsel %vm729, %v687, 0
    %v740 = vsel %vm729, %v688, 0
    %v743 = vsel %vm729, %v689, 0
    %v746 = vsel %vm729, %v690, 0
    %v749 = vsel %vm729, %v691, 0
    %v752 = vsel %vm729, %v692, 0
    %754 = vmatprep.subr.bf16.mxu0 %v718
    %755 = vmatpush1.bf16.msra.mxu0 %v717
    %756 = vmatprep.subr.bf16.mxu0 %v720
    %757 = vmatpush1.bf16.msra.mxu0 %v719
    %758 = vmatprep.subr.bf16.mxu0 %v722
    %759 = vmatpush1.bf16.msra.mxu0 %v721
    %760 = vmatprep.subr.bf16.mxu0 0
    %761 = vmatpush1.bf16.msra.mxu0 0
    %762 = vmatprep.subr.bf16.mxu0 0
    %763 = vmatpush1.bf16.msra.mxu0 0
    %764 = vmatprep.subr.bf16.mxu0 0
    %765 = vmatpush1.bf16.msra.mxu0 0
    %766 = vmatprep.subr.bf16.mxu0 0
    %767 = vmatpush1.bf16.msra.mxu0 0
    %768 = vmatprep.subr.bf16.mxu0 0
    %769 = vmatpush1.bf16.msra.mxu0 0
    %770 = vmatprep.subr.bf16.mxu0 0
    %771 = vmatpush1.bf16.msra.mxu0 0
    %772 = vmatprep.subr.bf16.mxu0 0
    %773 = vmatpush1.bf16.msra.mxu0 0
    %774 = vmatprep.subr.bf16.mxu0 0
    %775 = vmatpush1.bf16.msra.mxu0 0
    %776 = vmatprep.subr.bf16.mxu0 0
    %777 = vmatpush1.bf16.msra.mxu0 0
    %778 = vmatprep.subr.bf16.mxu0 0
    %779 = vmatpush1.bf16.msra.mxu0 0
    %780 = vmatprep.subr.bf16.mxu0 0
    %781 = vmatpush1.bf16.msra.mxu0 0
    %782 = vmatprep.subr.bf16.mxu0 0
    %783 = vmatpush1.bf16.msra.mxu0 0
    %784 = vmatprep.subr.bf16.mxu0 0
    %785 = vmatpush1.bf16.msra.mxu0 0
    %786 = vmatprep.mubr.bf16.mxu0 0
    %787 = vmatmul.mubr.bf16.gmra.mrb[0].mxu0 %v731
    %v788 = vpop.f32.mrb[0].mxu0
    %v789 = vadd.f32 0.0, %v788
    %v790 = vpop.f32.mrb[0].mxu0
    %v791 = vadd.f32 0.0, %v790
    %v792 = vpop.f32.mrb[0].mxu0
    %v793 = vadd.f32 0.0, %v792
    %v794 = vpop.f32.mrb[0].mxu0
    %v795 = vadd.f32 0.0, %v794
    %796 = vmatprep.mubr.bf16.mxu0 0
    %797 = vmatmul.mubr.bf16.gmra.mrb[0].mxu0 %v734
    %v798 = vpop.f32.mrb[0].mxu0
    %v799 = vadd.f32 0.0, %v798
    %v800 = vpop.f32.mrb[0].mxu0
    %v801 = vadd.f32 0.0, %v800
    %v802 = vpop.f32.mrb[0].mxu0
    %v803 = vadd.f32 0.0, %v802
    %v804 = vpop.f32.mrb[0].mxu0
    %v805 = vadd.f32 0.0, %v804
    %806 = vmatprep.mubr.bf16.mxu0 0
    %807 = vmatmul.mubr.bf16.gmra.mrb[0].mxu0 %v737
    %v808 = vpop.f32.mrb[0].mxu0
    %v809 = vadd.f32 0.0, %v808
    %v810 = vpop.f32.mrb[0].mxu0
    %v811 = vadd.f32 0.0, %v810
    %v812 = vpop.f32.mrb[0].mxu0
    %v813 = vadd.f32 0.0, %v812
    %v814 = vpop.f32.mrb[0].mxu0
    %v815 = vadd.f32 0.0, %v814
    %816 = vmatprep.mubr.bf16.mxu0 0
    %817 = vmatmul.mubr.bf16.gmra.mrb[0].mxu0 %v740
    %v818 = vpop.f32.mrb[0].mxu0
    %v819 = vadd.f32 0.0, %v818
    %v820 = vpop.f32.mrb[0].mxu0
    %v821 = vadd.f32 0.0, %v820
    %v822 = vpop.f32.mrb[0].mxu0
    %v823 = vadd.f32 0.0, %v822
    %v824 = vpop.f32.mrb[0].mxu0
    %v825 = vadd.f32 0.0, %v824
    %826 = vmatprep.mubr.bf16.mxu0 0
    %827 = vmatmul.mubr.bf16.gmra.mrb[0].mxu0 %v743
    %v828 = vpop.f32.mrb[0].mxu0
    %v829 = vadd.f32 0.0, %v828
    %v830 = vpop.f32.mrb[0].mxu0
    %v831 = vadd.f32 0.0, %v830
    %v832 = vpop.f32.mrb[0].mxu0
    %v833 = vadd.f32 0.0, %v832
    %v834 = vpop.f32.mrb[0].mxu0
    %v835 = vadd.f32 0.0, %v834
    %836 = vmatprep.mubr.bf16.mxu0 0
    %837 = vmatmul.mubr.bf16.gmra.mrb[0].mxu0 %v746
    %v838 = vpop.f32.mrb[0].mxu0
    %v839 = vadd.f32 0.0, %v838
    %v840 = vpop.f32.mrb[0].mxu0
    %v841 = vadd.f32 0.0, %v840
    %v842 = vpop.f32.mrb[0].mxu0
    %v843 = vadd.f32 0.0, %v842
    %v844 = vpop.f32.mrb[0].mxu0
    %v845 = vadd.f32 0.0, %v844
    %846 = vmatprep.mubr.bf16.mxu0 0
    %847 = vmatmul.mubr.bf16.gmra.mrb[0].mxu0 %v749
    %v848 = vpop.f32.mrb[0].mxu0
    %v849 = vadd.f32 0.0, %v848
    %v850 = vpop.f32.mrb[0].mxu0
    %v851 = vadd.f32 0.0, %v850
    %v852 = vpop.f32.mrb[0].mxu0
    %v853 = vadd.f32 0.0, %v852
    %v854 = vpop.f32.mrb[0].mxu0
    %v855 = vadd.f32 0.0, %v854
    %856 = vmatprep.mubr.bf16.mxu0 0
    %857 = vmatmul.mubr.bf16.gmra.mrb[0].mxu0 %v752
    %v858 = vpop.f32.mrb[0].mxu0
    %v859 = vadd.f32 0.0, %v858
    %v860 = vpop.f32.mrb[0].mxu0
    %v861 = vadd.f32 0.0, %v860
    %v862 = vpop.f32.mrb[0].mxu0
    %v863 = vadd.f32 0.0, %v862
    %v864 = vpop.f32.mrb[0].mxu0
    %v865 = vadd.f32 0.0, %v864
    %866 = vdwg.mxu0
    %v867 = vmul.f32 %v789, 0.5
    %v868 = vmul.f32 %v791, 0.5
    %v869 = vmul.f32 %v793, 0.5
    %v870 = vmul.f32 %v795, 0.5
    %v871 = vmul.f32 %v799, 0.5
    %v872 = vmul.f32 %v801, 0.5
    %v873 = vmul.f32 %v803, 0.5
    %v874 = vmul.f32 %v805, 0.5
    %v875 = vmul.f32 %v809, 0.5
    %v876 = vmul.f32 %v811, 0.5
    %v877 = vmul.f32 %v813, 0.5
    %v878 = vmul.f32 %v815, 0.5
    %v879 = vmul.f32 %v819, 0.5
    %v880 = vmul.f32 %v821, 0.5
    %v881 = vmul.f32 %v823, 0.5
    %v882 = vmul.f32 %v825, 0.5
    %v883 = vmul.f32 %v829, 0.5
    %v884 = vmul.f32 %v831, 0.5
    %v885 = vmul.f32 %v833, 0.5
    %v886 = vmul.f32 %v835, 0.5
    %v887 = vmul.f32 %v839, 0.5
    %v888 = vmul.f32 %v841, 0.5
    %v889 = vmul.f32 %v843, 0.5
    %v890 = vmul.f32 %v845, 0.5
    %v891 = vmul.f32 %v849, 0.5
    %v892 = vmul.f32 %v851, 0.5
    %v893 = vmul.f32 %v853, 0.5
    %v894 = vmul.f32 %v855, 0.5
    %v895 = vmul.f32 %v859, 0.5
    %v896 = vmul.f32 %v861, 0.5
    %v897 = vmul.f32 %v863, 0.5
    %v898 = vmul.f32 %v865, 0.5
    %v899 = vtanh.pop %v867
    %v900 = vtanh.pop %v868
    %v901 = vtanh.pop %v869
    %v902 = vtanh.pop %v870
    %v903 = vtanh.pop %v871
    %v904 = vtanh.pop %v872
    %v905 = vtanh.pop %v873
    %v906 = vtanh.pop %v874
    %v907 = vtanh.pop %v875
    %v908 = vtanh.pop %v876
    %v909 = vtanh.pop %v877
    %v910 = vtanh.pop %v878
    %v911 = vtanh.pop %v879
    %v912 = vtanh.pop %v880
    %v913 = vtanh.pop %v881
    %v914 = vtanh.pop %v882
    %v915 = vtanh.pop %v883
    %v916 = vtanh.pop %v884
    %v917 = vtanh.pop %v885
    %v918 = vtanh.pop %v886
    %v919 = vtanh.pop %v887
    %v920 = vtanh.pop %v888
    %v921 = vtanh.pop %v889
    %v922 = vtanh.pop %v890
    %v923 = vtanh.pop %v891
    %v924 = vtanh.pop %v892
    %v925 = vtanh.pop %v893
    %v926 = vtanh.pop %v894
    %v927 = vtanh.pop %v895
    %v928 = vtanh.pop %v896
    %v929 = vtanh.pop %v897
    %v930 = vtanh.pop %v898
    %v931 = vmul.f32 %v899, 0.5
    %v932 = vmul.f32 %v900, 0.5
    %v933 = vmul.f32 %v901, 0.5
    %v934 = vmul.f32 %v902, 0.5
    %v935 = vmul.f32 %v903, 0.5
    %v936 = vmul.f32 %v904, 0.5
    %v937 = vmul.f32 %v905, 0.5
    %v938 = vmul.f32 %v906, 0.5
    %v939 = vmul.f32 %v907, 0.5
    %v940 = vmul.f32 %v908, 0.5
    %v941 = vmul.f32 %v909, 0.5
    %v942 = vmul.f32 %v910, 0.5
    %v943 = vmul.f32 %v911, 0.5
    %v944 = vmul.f32 %v912, 0.5
    %v945 = vmul.f32 %v913, 0.5
    %v946 = vmul.f32 %v914, 0.5
    %v947 = vmul.f32 %v915, 0.5
    %v948 = vmul.f32 %v916, 0.5
    %v949 = vmul.f32 %v917, 0.5
    %v950 = vmul.f32 %v918, 0.5
    %v951 = vmul.f32 %v919, 0.5
    %v952 = vmul.f32 %v920, 0.5
    %v953 = vmul.f32 %v921, 0.5
    %v954 = vmul.f32 %v922, 0.5
    %v955 = vmul.f32 %v923, 0.5
    %v956 = vmul.f32 %v924, 0.5
    %v957 = vmul.f32 %v925, 0.5
    %v958 = vmul.f32 %v926, 0.5
    %v959 = vmul.f32 %v927, 0.5
    %v960 = vmul.f32 %v928, 0.5
    %v961 = vmul.f32 %v929, 0.5
    %v962 = vmul.f32 %v930, 0.5
    %v963 = vadd.f32 %v931, 0.5
    %v964 = vadd.f32 %v932, 0.5
    %v965 = vadd.f32 %v933, 0.5
    %v966 = vadd.f32 %v934, 0.5
    %v967 = vadd.f32 %v935, 0.5
    %v968 = vadd.f32 %v936, 0.5
    %v969 = vadd.f32 %v937, 0.5
    %v970 = vadd.f32 %v938, 0.5
    %v971 = vadd.f32 %v939, 0.5
    %v972 = vadd.f32 %v940, 0.5
    %v973 = vadd.f32 %v941, 0.5
    %v974 = vadd.f32 %v942, 0.5
    %v975 = vadd.f32 %v943, 0.5
    %v976 = vadd.f32 %v944, 0.5
    %v977 = vadd.f32 %v945, 0.5
    %v978 = vadd.f32 %v946, 0.5
    %v979 = vadd.f32 %v947, 0.5
    %v980 = vadd.f32 %v948, 0.5
    %v981 = vadd.f32 %v949, 0.5
    %v982 = vadd.f32 %v950, 0.5
    %v983 = vadd.f32 %v951, 0.5
    %v984 = vadd.f32 %v952, 0.5
    %v985 = vadd.f32 %v953, 0.5
    %v986 = vadd.f32 %v954, 0.5
    %v987 = vadd.f32 %v955, 0.5
    %v988 = vadd.f32 %v956, 0.5
    %v989 = vadd.f32 %v957, 0.5
    %v990 = vadd.f32 %v958, 0.5
    %v991 = vadd.f32 %v959, 0.5
    %v992 = vadd.f32 %v960, 0.5
    %v993 = vadd.f32 %v961, 0.5
    %v994 = vadd.f32 %v962, 0.5
    %v995 = vmul.f32 %v789, %v963
    %v996 = vmul.f32 %v791, %v964
    %v997 = vmul.f32 %v793, %v965
    %v998 = vmul.f32 %v795, %v966
    %v999 = vmul.f32 %v799, %v967
    %v1000 = vmul.f32 %v801, %v968
    %v1001 = vmul.f32 %v803, %v969
    %v1002 = vmul.f32 %v805, %v970
    %v1003 = vmul.f32 %v809, %v971
    %v1004 = vmul.f32 %v811, %v972
    %v1005 = vmul.f32 %v813, %v973
    %v1006 = vmul.f32 %v815, %v974
    %v1007 = vmul.f32 %v819, %v975
    %v1008 = vmul.f32 %v821, %v976
    %v1009 = vmul.f32 %v823, %v977
    %v1010 = vmul.f32 %v825, %v978
    %v1011 = vmul.f32 %v829, %v979
    %v1012 = vmul.f32 %v831, %v980
    %v1013 = vmul.f32 %v833, %v981
    %v1014 = vmul.f32 %v835, %v982
    %v1015 = vmul.f32 %v839, %v983
    %v1016 = vmul.f32 %v841, %v984
    %v1017 = vmul.f32 %v843, %v985
    %v1018 = vmul.f32 %v845, %v986
    %v1019 = vmul.f32 %v849, %v987
    %v1020 = vmul.f32 %v851, %v988
    %v1021 = vmul.f32 %v853, %v989
    %v1022 = vmul.f32 %v855, %v990
    %v1023 = vmul.f32 %v859, %v991
    %v1024 = vmul.f32 %v861, %v992
    %v1025 = vmul.f32 %v863, %v993
    %v1026 = vmul.f32 %v865, %v994
    %v1027 = vmul.f32 %v995, %v995
    %v1028 = vmul.f32 %v996, %v996
    %v1029 = vmul.f32 %v997, %v997
    %v1030 = vmul.f32 %v998, %v998
    %v1031 = vmul.f32 %v999, %v999
    %v1032 = vmul.f32 %v1000, %v1000
    %v1033 = vmul.f32 %v1001, %v1001
    %v1034 = vmul.f32 %v1002, %v1002
    %v1035 = vmul.f32 %v1003, %v1003
    %v1036 = vmul.f32 %v1004, %v1004
    %v1037 = vmul.f32 %v1005, %v1005
    %v1038 = vmul.f32 %v1006, %v1006
    %v1039 = vmul.f32 %v1007, %v1007
    %v1040 = vmul.f32 %v1008, %v1008
    %v1041 = vmul.f32 %v1009, %v1009
    %v1042 = vmul.f32 %v1010, %v1010
    %v1043 = vmul.f32 %v1011, %v1011
    %v1044 = vmul.f32 %v1012, %v1012
    %v1045 = vmul.f32 %v1013, %v1013
    %v1046 = vmul.f32 %v1014, %v1014
    %v1047 = vmul.f32 %v1015, %v1015
    %v1048 = vmul.f32 %v1016, %v1016
    %v1049 = vmul.f32 %v1017, %v1017
    %v1050 = vmul.f32 %v1018, %v1018
    %v1051 = vmul.f32 %v1019, %v1019
    %v1052 = vmul.f32 %v1020, %v1020
    %v1053 = vmul.f32 %v1021, %v1021
    %v1054 = vmul.f32 %v1022, %v1022
    %v1055 = vmul.f32 %v1023, %v1023
    %v1056 = vmul.f32 %v1024, %v1024
    %v1057 = vmul.f32 %v1025, %v1025
    %v1058 = vmul.f32 %v1026, %v1026
    %v1059 = vld [vmem:[#allocation2] sm:$0xff]
    %v1060 = vld [vmem:[#allocation2 + $0x8] sm:$0xff]
    %v1061 = vld [vmem:[#allocation2 + $0x10] sm:$0xff]
    %v1062 = vld [vmem:[#allocation2 + $0x18] sm:$0xff]
    %v1063 = vld [vmem:[#allocation2 + $0x20] sm:$0xff]
    %v1064 = vld [vmem:[#allocation2 + $0x28] sm:$0xff]
    %v1065 = vld [vmem:[#allocation2 + $0x30] sm:$0xff]
    %v1066 = vld [vmem:[#allocation2 + $0x38] sm:$0xff]
    %v1067 = vld [vmem:[#allocation2 + $0x40] sm:$0xff]
    %v1068 = vld [vmem:[#allocation2 + $0x48] sm:$0xff]
    %v1069 = vld [vmem:[#allocation2 + $0x50] sm:$0xff]
    %v1070 = vld [vmem:[#allocation2 + $0x58] sm:$0xff]
    %v1071 = vld [vmem:[#allocation2 + $0x60] sm:$0xff]
    %v1072 = vld [vmem:[#allocation2 + $0x68] sm:$0xff]
    %v1073 = vld [vmem:[#allocation2 + $0x70] sm:$0xff]
    %v1074 = vld [vmem:[#allocation2 + $0x78] sm:$0xff]
    %v1075 = vld [vmem:[#allocation2 + $0x80] sm:$0xff]
    %v1076 = vld [vmem:[#allocation2 + $0x88] sm:$0xff]
    %v1077 = vld [vmem:[#allocation2 + $0x90] sm:$0xff]
    %v1078 = vld [vmem:[#allocation2 + $0x98] sm:$0xff]
    %v1079 = vld [vmem:[#allocation2 + $0xa0] sm:$0xff]
    %v1080 = vld [vmem:[#allocation2 + $0xa8] sm:$0xff]
    %v1081 = vld [vmem:[#allocation2 + $0xb0] sm:$0xff]
    %v1082 = vld [vmem:[#allocation2 + $0xb8] sm:$0xff]
    %v1083 = vld [vmem:[#allocation2 + $0xc0] sm:$0xff]
    %v1084 = vld [vmem:[#allocation2 + $0xc8] sm:$0xff]
    %v1085 = vld [vmem:[#allocation2 + $0xd0] sm:$0xff]
    %v1086 = vld [vmem:[#allocation2 + $0xd8] sm:$0xff]
    %v1087 = vld [vmem:[#allocation2 + $0xe0] sm:$0xff]
    %v1088 = vld [vmem:[#allocation2 + $0xe8] sm:$0xff]
    %v1089 = vld [vmem:[#allocation2 + $0xf0] sm:$0xff]
    %v1090 = vld [vmem:[#allocation2 + $0xf8] sm:$0xff]
    %v1091 = vld [vmem:[#allocation2 + $0x100] sm:$0xff]
    %v1092 = vld [vmem:[#allocation2 + $0x108] sm:$0xff]
    %v1093 = vld [vmem:[#allocation2 + $0x110] sm:$0xff]
    %v1094 = vld [vmem:[#allocation2 + $0x118] sm:$0xff]
    %v1095 = vld [vmem:[#allocation2 + $0x120] sm:$0xff]
    %v1096 = vld [vmem:[#allocation2 + $0x128] sm:$0xff]
    %v1097 = vld [vmem:[#allocation2 + $0x130] sm:$0xff]
    %v1098 = vld [vmem:[#allocation2 + $0x138] sm:$0xff]
    %v1099 = vld [vmem:[#allocation2 + $0x140] sm:$0xff]
    %v1100 = vld [vmem:[#allocation2 + $0x148] sm:$0xff]
    %v1101 = vld [vmem:[#allocation2 + $0x150] sm:$0xff]
    %v1102 = vld [vmem:[#allocation2 + $0x158] sm:$0xff]
    %v1103 = vld [vmem:[#allocation2 + $0x160] sm:$0xff]
    %v1104 = vld [vmem:[#allocation2 + $0x168] sm:$0xff]
    %v1105 = vld [vmem:[#allocation2 + $0x170] sm:$0xff]
    %v1106 = vld [vmem:[#allocation2 + $0x178] sm:$0xff]
    %v1107 = vld [vmem:[#allocation2 + $0x180] sm:$0xff]
    %v1108 = vld [vmem:[#allocation2 + $0x188] sm:$0xff]
    %v1109 = vld [vmem:[#allocation2 + $0x190] sm:$0xff]
    %v1110 = vld [vmem:[#allocation2 + $0x198] sm:$0xff]
    %v1111 = vld [vmem:[#allocation2 + $0x1a0] sm:$0xff]
    %v1112 = vld [vmem:[#allocation2 + $0x1a8] sm:$0xff]
    %v1113 = vld [vmem:[#allocation2 + $0x1b0] sm:$0xff]
    %v1114 = vld [vmem:[#allocation2 + $0x1b8] sm:$0xff]
    %v1115 = vld [vmem:[#allocation2 + $0x1c0] sm:$0xff]
    %v1116 = vld [vmem:[#allocation2 + $0x1c8] sm:$0xff]
    %v1117 = vld [vmem:[#allocation2 + $0x1d0] sm:$0xff]
    %v1118 = vld [vmem:[#allocation2 + $0x1d8] sm:$0xff]
    %v1119 = vld [vmem:[#allocation2 + $0x1e0] sm:$0xff]
    %v1120 = vld [vmem:[#allocation2 + $0x1e8] sm:$0xff]
    %v1121 = vld [vmem:[#allocation2 + $0x1f0] sm:$0xff]
    %v1122 = vld [vmem:[#allocation2 + $0x1f8] sm:$0xff]
    %v1123 = vld [vmem:[#allocation2 + $0x200] sm:$0xff]
    %v1124 = vld [vmem:[#allocation2 + $0x208] sm:$0xff]
    %v1125 = vld [vmem:[#allocation2 + $0x210] sm:$0xff]
    %v1126 = vld [vmem:[#allocation2 + $0x218] sm:$0xff]
    %v1127 = vld [vmem:[#allocation2 + $0x220] sm:$0xff]
    %v1128 = vld [vmem:[#allocation2 + $0x228] sm:$0xff]
    %v1129 = vld [vmem:[#allocation2 + $0x230] sm:$0xff]
    %v1130 = vld [vmem:[#allocation2 + $0x238] sm:$0xff]
    %v1131 = vld [vmem:[#allocation2 + $0x240] sm:$0xff]
    %v1132 = vld [vmem:[#allocation2 + $0x248] sm:$0xff]
    %v1133 = vld [vmem:[#allocation2 + $0x250] sm:$0xff]
    %v1134 = vld [vmem:[#allocation2 + $0x258] sm:$0xff]
    %v1135 = vld [vmem:[#allocation2 + $0x260] sm:$0xff]
    %v1136 = vld [vmem:[#allocation2 + $0x268] sm:$0xff]
    %v1137 = vld [vmem:[#allocation2 + $0x270] sm:$0xff]
    %v1138 = vld [vmem:[#allocation2 + $0x278] sm:$0xff]
    %v1139 = vld [vmem:[#allocation2 + $0x280] sm:$0xff]
    %v1140 = vld [vmem:[#allocation2 + $0x288] sm:$0xff]
    %v1141 = vld [vmem:[#allocation2 + $0x290] sm:$0xff]
    %v1142 = vld [vmem:[#allocation2 + $0x298] sm:$0xff]
    %v1143 = vld [vmem:[#allocation2 + $0x2a0] sm:$0xff]
    %v1144 = vld [vmem:[#allocation2 + $0x2a8] sm:$0xff]
    %v1145 = vld [vmem:[#allocation2 + $0x2b0] sm:$0xff]
    %v1146 = vld [vmem:[#allocation2 + $0x2b8] sm:$0xff]
    %v1147 = vld [vmem:[#allocation2 + $0x2c0] sm:$0xff]
    %v1148 = vld [vmem:[#allocation2 + $0x2c8] sm:$0xff]
    %v1149 = vld [vmem:[#allocation2 + $0x2d0] sm:$0xff]
    %v1150 = vld [vmem:[#allocation2 + $0x2d8] sm:$0xff]
    %v1151 = vld [vmem:[#allocation2 + $0x2e0] sm:$0xff]
    %v1152 = vld [vmem:[#allocation2 + $0x2e8] sm:$0xff]
    %v1153 = vld [vmem:[#allocation2 + $0x2f0] sm:$0xff]
    %v1154 = vld [vmem:[#allocation2 + $0x2f8] sm:$0xff]
    %v1155 = vld [vmem:[#allocation2 + $0x300] sm:$0xff]
    %v1156 = vld [vmem:[#allocation2 + $0x308] sm:$0xff]
    %v1157 = vld [vmem:[#allocation2 + $0x310] sm:$0xff]
    %v1158 = vld [vmem:[#allocation2 + $0x318] sm:$0xff]
    %v1159 = vld [vmem:[#allocation2 + $0x320] sm:$0xff]
    %v1160 = vld [vmem:[#allocation2 + $0x328] sm:$0xff]
    %v1161 = vld [vmem:[#allocation2 + $0x330] sm:$0xff]
    %v1162 = vld [vmem:[#allocation2 + $0x338] sm:$0xff]
    %v1163 = vld [vmem:[#allocation2 + $0x340] sm:$0xff]
    %v1164 = vld [vmem:[#allocation2 + $0x348] sm:$0xff]
    %v1165 = vld [vmem:[#allocation2 + $0x350] sm:$0xff]
    %v1166 = vld [vmem:[#allocation2 + $0x358] sm:$0xff]
    %v1167 = vld [vmem:[#allocation2 + $0x360] sm:$0xff]
    %v1168 = vld [vmem:[#allocation2 + $0x368] sm:$0xff]
    %v1169 = vld [vmem:[#allocation2 + $0x370] sm:$0xff]
    %v1170 = vld [vmem:[#allocation2 + $0x378] sm:$0xff]
    %v1171 = vld [vmem:[#allocation2 + $0x380] sm:$0xff]
    %v1172 = vld [vmem:[#allocation2 + $0x388] sm:$0xff]
    %v1173 = vld [vmem:[#allocation2 + $0x390] sm:$0xff]
    %v1174 = vld [vmem:[#allocation2 + $0x398] sm:$0xff]
    %v1175 = vld [vmem:[#allocation2 + $0x3a0] sm:$0xff]
    %v1176 = vld [vmem:[#allocation2 + $0x3a8] sm:$0xff]
    %v1177 = vld [vmem:[#allocation2 + $0x3b0] sm:$0xff]
    %v1178 = vld [vmem:[#allocation2 + $0x3b8] sm:$0xff]
    %v1179 = vld [vmem:[#allocation2 + $0x3c0] sm:$0xff]
    %v1180 = vld [vmem:[#allocation2 + $0x3c8] sm:$0xff]
    %v1181 = vld [vmem:[#allocation2 + $0x3d0] sm:$0xff]
    %v1182 = vld [vmem:[#allocation2 + $0x3d8] sm:$0xff]
    %v1183 = vld [vmem:[#allocation2 + $0x3e0] sm:$0xff]
    %vm1184 = vcmask 588800
    %v1186 = vsel %vm1184, %v1028, 0
    %v1189 = vsel %vm1184, %v1030, 0
    %v1192 = vsel %vm1184, %v1032, 0
    %v1195 = vsel %vm1184, %v1034, 0
    %v1198 = vsel %vm1184, %v1036, 0
    %v1201 = vsel %vm1184, %v1038, 0
    %v1204 = vsel %vm1184, %v1040, 0
    %v1207 = vsel %vm1184, %v1042, 0
    %v1210 = vsel %vm1184, %v1044, 0
    %v1213 = vsel %vm1184, %v1046, 0
    %v1216 = vsel %vm1184, %v1048, 0
    %v1219 = vsel %vm1184, %v1050, 0
    %v1222 = vsel %vm1184, %v1052, 0
    %v1225 = vsel %vm1184, %v1054, 0
    %v1228 = vsel %vm1184, %v1056, 0
    %v1231 = vsel %vm1184, %v1058, 0
    %1233 = vmatprep.subr.mxu0 %v1060
    %1234 = vmatpush1.msra.mxu0 %v1059
    %1235 = vmatprep.subr.mxu0 %v1065
    %1236 = vmatpush1.msra.mxu0 %v1064
    %1237 = vmatprep.subr.mxu0 %v1070
    %1238 = vmatpush1.msra.mxu0 %v1069
    %1239 = vmatprep.subr.mxu0 %v1075
    %1240 = vmatpush1.msra.mxu0 %v1074
    %1241 = vmatprep.subr.mxu0 %v1080
    %1242 = vmatpush1.msra.mxu0 %v1079
    %1243 = vmatprep.subr.mxu0 %v1085
    %1244 = vmatpush1.msra.mxu0 %v1084
    %1245 = vmatprep.subr.mxu0 %v1090
    %1246 = vmatpush1.msra.mxu0 %v1089
    %1247 = vmatprep.subr.mxu0 %v1095
    %1248 = vmatpush1.msra.mxu0 %v1094
    %1249 = vmatprep.subr.mxu0 %v1100
    %1250 = vmatpush1.msra.mxu0 %v1099
    %1251 = vmatprep.subr.mxu0 %v1105
    %1252 = vmatpush1.msra.mxu0 %v1104
    %1253 = vmatprep.subr.mxu0 %v1110
    %1254 = vmatpush1.msra.mxu0 %v1109
    %1255 = vmatprep.subr.mxu0 %v1115
    %1256 = vmatpush1.msra.mxu0 %v1114
    %1257 = vmatprep.subr.mxu0 %v1120
    %1258 = vmatpush1.msra.mxu0 %v1119
    %1259 = vmatprep.subr.mxu0 %v1125
    %1260 = vmatpush1.msra.mxu0 %v1124
    %1261 = vmatprep.subr.mxu0 %v1130
    %1262 = vmatpush1.msra.mxu0 %v1129
    %1263 = vmatprep.subr.mxu0 %v1135
    %1264 = vmatpush1.msra.mxu0 %v1134
    %1265 = vmatprep.subr.mxu0 %v1140
    %1266 = vmatpush1.msra.mxu0 %v1139
    %1267 = vmatprep.subr.mxu0 %v1145
    %1268 = vmatpush1.msra.mxu0 %v1144
    %1269 = vmatprep.subr.mxu0 %v1150
    %1270 = vmatpush1.msra.mxu0 %v1149
    %1271 = vmatprep.subr.mxu0 %v1155
    %1272 = vmatpush1.msra.mxu0 %v1154
    %1273 = vmatprep.subr.mxu0 %v1160
    %1274 = vmatpush1.msra.mxu0 %v1159
    %1275 = vmatprep.subr.mxu0 %v1165
    %1276 = vmatpush1.msra.mxu0 %v1164
    %1277 = vmatprep.subr.mxu0 %v1170
    %1278 = vmatpush1.msra.mxu0 %v1169
    %1279 = vmatprep.subr.mxu0 %v1175
    %1280 = vmatpush1.msra.mxu0 %v1174
    %1281 = vmatprep.subr.mxu0 %v1180
    %1282 = vmatpush1.msra.mxu0 %v1179
    %1283 = vmatprep.subr.mxu0 0.0
    %1284 = vmatpush1.msra.mxu0 0.0
    %1285 = vmatprep.subr.mxu0 0.0
    %1286 = vmatpush1.msra.mxu0 0.0
    %1287 = vmatprep.subr.mxu0 0.0
    %1288 = vmatpush1.msra.mxu0 0.0
    %1289 = vmatprep.subr.mxu0 0.0
    %1290 = vmatpush1.msra.mxu0 0.0
    %1291 = vmatprep.subr.mxu0 0.0
    %1292 = vmatpush1.msra.mxu0 0.0
    %1293 = vmatprep.subr.mxu0 0.0
    %1294 = vmatpush1.msra.mxu0 0.0
    %1295 = vmatprep.subr.mxu0 0.0
    %1296 = vmatpush1.msra.mxu0 0.0
    %1297 = vmatprep.mubr.f32.mxu0 %v1186
    %1298 = vmatmul.mubr.f32.gmra.mrb[0].mxu0 %v1027
    %v1299 = vpop.f32.mrb[0].mxu0
    %v1300 = vadd.f32 0.0, %v1299
    %v1301 = vpop.f32.mrb[0].mxu0
    %v1302 = vadd.f32 0.0, %v1301
    %1303 = vmatprep.mubr.f32.mxu0 %v1189
    %1304 = vmatmul.mubr.f32.gmra.mrb[0].mxu0 %v1029
    %v1305 = vpop.f32.mrb[0].mxu0
    %v1306 = vadd.f32 0.0, %v1305
    %v1307 = vpop.f32.mrb[0].mxu0
    %v1308 = vadd.f32 0.0, %v1307
    %1309 = vmatprep.mubr.f32.mxu0 %v1192
    %1310 = vmatmul.mubr.f32.gmra.mrb[0].mxu0 %v1031
    %v1311 = vpop.f32.mrb[0].mxu0
    %v1312 = vadd.f32 0.0, %v1311
    %v1313 = vpop.f32.mrb[0].mxu0
    %v1314 = vadd.f32 0.0, %v1313
    %1315 = vmatprep.mubr.f32.mxu0 %v1195
    %1316 = vmatmul.mubr.f32.gmra.mrb[0].mxu0 %v1033
    %v1317 = vpop.f32.mrb[0].mxu0
    %v1318 = vadd.f32 0.0, %v1317
    %v1319 = vpop.f32.mrb[0].mxu0
    %v1320 = vadd.f32 0.0, %v1319
    %1321 = vmatprep.mubr.f32.mxu0 %v1198
    %1322 = vmatmul.mubr.f32.gmra.mrb[0].mxu0 %v1035
    %v1323 = vpop.f32.mrb[0].mxu0
    %v1324 = vadd.f32 0.0, %v1323
    %v1325 = vpop.f32.mrb[0].mxu0
    %v1326 = vadd.f32 0.0, %v1325
    %1327 = vmatprep.mubr.f32.mxu0 %v1201
    %1328 = vmatmul.mubr.f32.gmra.mrb[0].mxu0 %v1037
    %v1329 = vpop.f32.mrb[0].mxu0
    %v1330 = vadd.f32 0.0, %v1329
    %v1331 = vpop.f32.mrb[0].mxu0
    %v1332 = vadd.f32 0.0, %v1331
    %1333 = vmatprep.mubr.f32.mxu0 %v1204
    %1334 = vmatmul.mubr.f32.gmra.mrb[0].mxu0 %v1039
    %v1335 = vpop.f32.mrb[0].mxu0
    %v1336 = vadd.f32 0.0, %v1335
    %v1337 = vpop.f32.mrb[0].mxu0
    %v1338 = vadd.f32 0.0, %v1337
    %1339 = vmatprep.mubr.f32.mxu0 %v1207
    %1340 = vmatmul.mubr.f32.gmra.mrb[0].mxu0 %v1041
    %v1341 = vpop.f32.mrb[0].mxu0
    %v1342 = vadd.f32 0.0, %v1341
    %v1343 = vpop.f32.mrb[0].mxu0
    %v1344 = vadd.f32 0.0, %v1343
    %1345 = vmatprep.mubr.f32.mxu0 %v1210
    %1346 = vmatmul.mubr.f32.gmra.mrb[0].mxu0 %v1043
    %v1347 = vpop.f32.mrb[0].mxu0
    %v1348 = vadd.f32 0.0, %v1347
    %v1349 = vpop.f32.mrb[0].mxu0
    %v1350 = vadd.f32 0.0, %v1349
    %1351 = vmatprep.mubr.f32.mxu0 %v1213
    %1352 = vmatmul.mubr.f32.gmra.mrb[0].mxu0 %v1045
    %v1353 = vpop.f32.mrb[0].mxu0
    %v1354 = vadd.f32 0.0, %v1353
    %v1355 = vpop.f32.mrb[0].mxu0
    %v1356 = vadd.f32 0.0, %v1355
    %1357 = vmatprep.mubr.f32.mxu0 %v1216
    %1358 = vmatmul.mubr.f32.gmra.mrb[0].mxu0 %v1047
    %v1359 = vpop.f32.mrb[0].mxu0
    %v1360 = vadd.f32 0.0, %v1359
    %v1361 = vpop.f32.mrb[0].mxu0
    %v1362 = vadd.f32 0.0, %v1361
    %1363 = vmatprep.mubr.f32.mxu0 %v1219
    %1364 = vmatmul.mubr.f32.gmra.mrb[0].mxu0 %v1049
    %v1365 = vpop.f32.mrb[0].mxu0
    %v1366 = vadd.f32 0.0, %v1365
    %v1367 = vpop.f32.mrb[0].mxu0
    %v1368 = vadd.f32 0.0, %v1367
    %1369 = vmatprep.mubr.f32.mxu0 %v1222
    %1370 = vmatmul.mubr.f32.gmra.mrb[0].mxu0 %v1051
    %v1371 = vpop.f32.mrb[0].mxu0
    %v1372 = vadd.f32 0.0, %v1371
    %v1373 = vpop.f32.mrb[0].mxu0
    %v1374 = vadd.f32 0.0, %v1373
    %1375 = vmatprep.mubr.f32.mxu0 %v1225
    %1376 = vmatmul.mubr.f32.gmra.mrb[0].mxu0 %v1053
    %v1377 = vpop.f32.mrb[0].mxu0
    %v1378 = vadd.f32 0.0, %v1377
    %v1379 = vpop.f32.mrb[0].mxu0
    %v1380 = vadd.f32 0.0, %v1379
    %1381 = vmatprep.mubr.f32.mxu0 %v1228
    %1382 = vmatmul.mubr.f32.gmra.mrb[0].mxu0 %v1055
    %v1383 = vpop.f32.mrb[0].mxu0
    %v1384 = vadd.f32 0.0, %v1383
    %v1385 = vpop.f32.mrb[0].mxu0
    %v1386 = vadd.f32 0.0, %v1385
    %1387 = vmatprep.mubr.f32.mxu0 %v1231
    %1388 = vmatmul.mubr.f32.gmra.mrb[0].mxu0 %v1057
    %v1389 = vpop.f32.mrb[0].mxu0
    %v1390 = vadd.f32 0.0, %v1389
    %v1391 = vpop.f32.mrb[0].mxu0
    %v1392 = vadd.f32 0.0, %v1391
    %1393 = vdwg.mxu0
    %1394 = vmatprep.subr.mxu0 %v1062
    %1395 = vmatpush1.msra.mxu0 %v1061
    %1396 = vmatprep.subr.mxu0 %v1067
    %1397 = vmatpush1.msra.mxu0 %v1066
    %1398 = vmatprep.subr.mxu0 %v1072
    %1399 = vmatpush1.msra.mxu0 %v1071
    %1400 = vmatprep.subr.mxu0 %v1077
    %1401 = vmatpush1.msra.mxu0 %v1076
    %1402 = vmatprep.subr.mxu0 %v1082
    %1403 = vmatpush1.msra.mxu0 %v1081
    %1404 = vmatprep.subr.mxu0 %v1087
    %1405 = vmatpush1.msra.mxu0 %v1086
    %1406 = vmatprep.subr.mxu0 %v1092
    %1407 = vmatpush1.msra.mxu0 %v1091
    %1408 = vmatprep.subr.mxu0 %v1097
    %1409 = vmatpush1.msra.mxu0 %v1096
    %1410 = vmatprep.subr.mxu0 %v1102
    %1411 = vmatpush1.msra.mxu0 %v1101
    %1412 = vmatprep.subr.mxu0 %v1107
    %1413 = vmatpush1.msra.mxu0 %v1106
    %1414 = vmatprep.subr.mxu0 %v1112
    %1415 = vmatpush1.msra.mxu0 %v1111
    %1416 = vmatprep.subr.mxu0 %v1117
    %1417 = vmatpush1.msra.mxu0 %v1116
    %1418 = vmatprep.subr.mxu0 %v1122
    %1419 = vmatpush1.msra.mxu0 %v1121
    %1420 = vmatprep.subr.mxu0 %v1127
    %1421 = vmatpush1.msra.mxu0 %v1126
    %1422 = vmatprep.subr.mxu0 %v1132
    %1423 = vmatpush1.msra.mxu0 %v1131
    %1424 = vmatprep.subr.mxu0 %v1137
    %1425 = vmatpush1.msra.mxu0 %v1136
    %1426 = vmatprep.subr.mxu0 %v1142
    %1427 = vmatpush1.msra.mxu0 %v1141
    %1428 = vmatprep.subr.mxu0 %v1147
    %1429 = vmatpush1.msra.mxu0 %v1146
    %1430 = vmatprep.subr.mxu0 %v1152
    %1431 = vmatpush1.msra.mxu0 %v1151
    %1432 = vmatprep.subr.mxu0 %v1157
    %1433 = vmatpush1.msra.mxu0 %v1156
    %1434 = vmatprep.subr.mxu0 %v1162
    %1435 = vmatpush1.msra.mxu0 %v1161
    %1436 = vmatprep.subr.mxu0 %v1167
    %1437 = vmatpush1.msra.mxu0 %v1166
    %1438 = vmatprep.subr.mxu0 %v1172
    %1439 = vmatpush1.msra.mxu0 %v1171
    %1440 = vmatprep.subr.mxu0 %v1177
    %1441 = vmatpush1.msra.mxu0 %v1176
    %1442 = vmatprep.subr.mxu0 %v1182
    %1443 = vmatpush1.msra.mxu0 %v1181
    %1444 = vmatprep.subr.mxu0 0.0
    %1445 = vmatpush1.msra.mxu0 0.0
    %1446 = vmatprep.subr.mxu0 0.0
    %1447 = vmatpush1.msra.mxu0 0.0
    %1448 = vmatprep.subr.mxu0 0.0
    %1449 = vmatpush1.msra.mxu0 0.0
    %1450 = vmatprep.subr.mxu0 0.0
    %1451 = vmatpush1.msra.mxu0 0.0
    %1452 = vmatprep.subr.mxu0 0.0
    %1453 = vmatpush1.msra.mxu0 0.0
    %1454 = vmatprep.subr.mxu0 0.0
    %1455 = vmatpush1.msra.mxu0 0.0
    %1456 = vmatprep.subr.mxu0 0.0
    %1457 = vmatpush1.msra.mxu0 0.0
    %1458 = vmatprep.mubr.f32.mxu0 %v1186
    %1459 = vmatmul.mubr.f32.gmra.mrb[0].mxu0 %v1027
    %v1460 = vpop.f32.mrb[0].mxu0
    %v1461 = vadd.f32 0.0, %v1460
    %v1462 = vpop.f32.mrb[0].mxu0
    %v1463 = vadd.f32 0.0, %v1462
    %1464 = vmatprep.mubr.f32.mxu0 %v1189
    %1465 = vmatmul.mubr.f32.gmra.mrb[0].mxu0 %v1029
    %v1466 = vpop.f32.mrb[0].mxu0
    %v1467 = vadd.f32 0.0, %v1466
    %v1468 = vpop.f32.mrb[0].mxu0
    %v1469 = vadd.f32 0.0, %v1468
    %1470 = vmatprep.mubr.f32.mxu0 %v1192
    %1471 = vmatmul.mubr.f32.gmra.mrb[0].mxu0 %v1031
    %v1472 = vpop.f32.mrb[0].mxu0
    %v1473 = vadd.f32 0.0, %v1472
    %v1474 = vpop.f32.mrb[0].mxu0
    %v1475 = vadd.f32 0.0, %v1474
    %1476 = vmatprep.mubr.f32.mxu0 %v1195
    %1477 = vmatmul.mubr.f32.gmra.mrb[0].mxu0 %v1033
    %v1478 = vpop.f32.mrb[0].mxu0
    %v1479 = vadd.f32 0.0, %v1478
    %v1480 = vpop.f32.mrb[0].mxu0
    %v1481 = vadd.f32 0.0, %v1480
    %1482 = vmatprep.mubr.f32.mxu0 %v1198
    %1483 = vmatmul.mubr.f32.gmra.mrb[0].mxu0 %v1035
    %v1484 = vpop.f32.mrb[0].mxu0
    %v1485 = vadd.f32 0.0, %v1484
    %v1486 = vpop.f32.mrb[0].mxu0
    %v1487 = vadd.f32 0.0, %v1486
    %1488 = vmatprep.mubr.f32.mxu0 %v1201
    %1489 = vmatmul.mubr.f32.gmra.mrb[0].mxu0 %v1037
    %v1490 = vpop.f32.mrb[0].mxu0
    %v1491 = vadd.f32 0.0, %v1490
    %v1492 = vpop.f32.mrb[0].mxu0
    %v1493 = vadd.f32 0.0, %v1492
    %1494 = vmatprep.mubr.f32.mxu0 %v1204
    %1495 = vmatmul.mubr.f32.gmra.mrb[0].mxu0 %v1039
    %v1496 = vpop.f32.mrb[0].mxu0
    %v1497 = vadd.f32 0.0, %v1496
    %v1498 = vpop.f32.mrb[0].mxu0
    %v1499 = vadd.f32 0.0, %v1498
    %1500 = vmatprep.mubr.f32.mxu0 %v1207
    %1501 = vmatmul.mubr.f32.gmra.mrb[0].mxu0 %v1041
    %v1502 = vpop.f32.mrb[0].mxu0
    %v1503 = vadd.f32 0.0, %v1502
    %v1504 = vpop.f32.mrb[0].mxu0
    %v1505 = vadd.f32 0.0, %v1504
    %1506 = vmatprep.mubr.f32.mxu0 %v1210
    %1507 = vmatmul.mubr.f32.gmra.mrb[0].mxu0 %v1043
    %v1508 = vpop.f32.mrb[0].mxu0
    %v1509 = vadd.f32 0.0, %v1508
    %v1510 = vpop.f32.mrb[0].mxu0
    %v1511 = vadd.f32 0.0, %v1510
    %1512 = vmatprep.mubr.f32.mxu0 %v1213
    %1513 = vmatmul.mubr.f32.gmra.mrb[0].mxu0 %v1045
    %v1514 = vpop.f32.mrb[0].mxu0
    %v1515 = vadd.f32 0.0, %v1514
    %v1516 = vpop.f32.mrb[0].mxu0
    %v1517 = vadd.f32 0.0, %v1516
    %1518 = vmatprep.mubr.f32.mxu0 %v1216
    %1519 = vmatmul.mubr.f32.gmra.mrb[0].mxu0 %v1047
    %v1520 = vpop.f32.mrb[0].mxu0
    %v1521 = vadd.f32 0.0, %v1520
    %v1522 = vpop.f32.mrb[0].mxu0
    %v1523 = vadd.f32 0.0, %v1522
    %1524 = vmatprep.mubr.f32.mxu0 %v1219
    %1525 = vmatmul.mubr.f32.gmra.mrb[0].mxu0 %v1049
    %v1526 = vpop.f32.mrb[0].mxu0
    %v1527 = vadd.f32 0.0, %v1526
    %v1528 = vpop.f32.mrb[0].mxu0
    %v1529 = vadd.f32 0.0, %v1528
    %1530 = vmatprep.mubr.f32.mxu0 %v1222
    %1531 = vmatmul.mubr.f32.gmra.mrb[0].mxu0 %v1051
    %v1532 = vpop.f32.mrb[0].mxu0
    %v1533 = vadd.f32 0.0, %v1532
    %v1534 = vpop.f32.mrb[0].mxu0
    %v1535 = vadd.f32 0.0, %v1534
    %1536 = vmatprep.mubr.f32.mxu0 %v1225
    %1537 = vmatmul.mubr.f32.gmra.mrb[0].mxu0 %v1053
    %v1538 = vpop.f32.mrb[0].mxu0
    %v1539 = vadd.f32 0.0, %v1538
    %v1540 = vpop.f32.mrb[0].mxu0
    %v1541 = vadd.f32 0.0, %v1540
    %1542 = vmatprep.mubr.f32.mxu0 %v1228
    %1543 = vmatmul.mubr.f32.gmra.mrb[0].mxu0 %v1055
    %v1544 = vpop.f32.mrb[0].mxu0
    %v1545 = vadd.f32 0.0, %v1544
    %v1546 = vpop.f32.mrb[0].mxu0
    %v1547 = vadd.f32 0.0, %v1546
    %1548 = vmatprep.mubr.f32.mxu0 %v1231
    %1549 = vmatmul.mubr.f32.gmra.mrb[0].mxu0 %v1057
    %v1550 = vpop.f32.mrb[0].mxu0
    %v1551 = vadd.f32 0.0, %v1550
    %v1552 = vpop.f32.mrb[0].mxu0
    %v1553 = vadd.f32 0.0, %v1552
    %1554 = vdwg.mxu0
    %1555 = vmatprep.subr.mxu0 0.0
    %1556 = vmatpush1.msra.mxu0 %v1063
    %1557 = vmatprep.subr.mxu0 0.0
    %1558 = vmatpush1.msra.mxu0 %v1068
    %1559 = vmatprep.subr.mxu0 0.0
    %1560 = vmatpush1.msra.mxu0 %v1073
    %1561 = vmatprep.subr.mxu0 0.0
    %1562 = vmatpush1.msra.mxu0 %v1078
    %1563 = vmatprep.subr.mxu0 0.0
    %1564 = vmatpush1.msra.mxu0 %v1083
    %1565 = vmatprep.subr.mxu0 0.0
    %1566 = vmatpush1.msra.mxu0 %v1088
    %1567 = vmatprep.subr.mxu0 0.0
    %1568 = vmatpush1.msra.mxu0 %v1093
    %1569 = vmatprep.subr.mxu0 0.0
    %1570 = vmatpush1.msra.mxu0 %v1098
    %1571 = vmatprep.subr.mxu0 0.0
    %1572 = vmatpush1.msra.mxu0 %v1103
    %1573 = vmatprep.subr.mxu0 0.0
    %1574 = vmatpush1.msra.mxu0 %v1108
    %1575 = vmatprep.subr.mxu0 0.0
    %1576 = vmatpush1.msra.mxu0 %v1113
    %1577 = vmatprep.subr.mxu0 0.0
    %1578 = vmatpush1.msra.mxu0 %v1118
    %1579 = vmatprep.subr.mxu0 0.0
    %1580 = vmatpush1.msra.mxu0 %v1123
    %1581 = vmatprep.subr.mxu0 0.0
    %1582 = vmatpush1.msra.mxu0 %v1128
    %1583 = vmatprep.subr.mxu0 0.0
    %1584 = vmatpush1.msra.mxu0 %v1133
    %1585 = vmatprep.subr.mxu0 0.0
    %1586 = vmatpush1.msra.mxu0 %v1138
    %1587 = vmatprep.subr.mxu0 0.0
    %1588 = vmatpush1.msra.mxu0 %v1143
    %1589 = vmatprep.subr.mxu0 0.0
    %1590 = vmatpush1.msra.mxu0 %v1148
    %1591 = vmatprep.subr.mxu0 0.0
    %1592 = vmatpush1.msra.mxu0 %v1153
    %1593 = vmatprep.subr.mxu0 0.0
    %1594 = vmatpush1.msra.mxu0 %v1158
    %1595 = vmatprep.subr.mxu0 0.0
    %1596 = vmatpush1.msra.mxu0 %v1163
    %1597 = vmatprep.subr.mxu0 0.0
    %1598 = vmatpush1.msra.mxu0 %v1168
    %1599 = vmatprep.subr.mxu0 0.0
    %1600 = vmatpush1.msra.mxu0 %v1173
    %1601 = vmatprep.subr.mxu0 0.0
    %1602 = vmatpush1.msra.mxu0 %v1178
    %1603 = vmatprep.subr.mxu0 0.0
    %1604 = vmatpush1.msra.mxu0 %v1183
    %1605 = vmatprep.subr.mxu0 0.0
    %1606 = vmatpush1.msra.mxu0 0.0
    %1607 = vmatprep.subr.mxu0 0.0
    %1608 = vmatpush1.msra.mxu0 0.0
    %1609 = vmatprep.subr.mxu0 0.0
    %1610 = vmatpush1.msra.mxu0 0.0
    %1611 = vmatprep.subr.mxu0 0.0
    %1612 = vmatpush1.msra.mxu0 0.0
    %1613 = vmatprep.subr.mxu0 0.0
    %1614 = vmatpush1.msra.mxu0 0.0
    %1615 = vmatprep.subr.mxu0 0.0
    %1616 = vmatpush1.msra.mxu0 0.0
    %1617 = vmatprep.subr.mxu0 0.0
    %1618 = vmatpush1.msra.mxu0 0.0
    %1619 = vmatprep.mubr.f32.mxu0 %v1186
    %1620 = vmatmul.mubr.f32.gmra.mrb[0].mxu0 %v1027
    %v1621 = vpop.f32.mrb[0].mxu0
    %v1622 = vadd.f32 0.0, %v1621
    %v1623 = vpop.f32.mrb[0].mxu0
    %1624 = vmatprep.mubr.f32.mxu0 %v1189
    %1625 = vmatmul.mubr.f32.gmra.mrb[0].mxu0 %v1029
    %v1626 = vpop.f32.mrb[0].mxu0
    %v1627 = vadd.f32 0.0, %v1626
    %v1628 = vpop.f32.mrb[0].mxu0
    %1629 = vmatprep.mubr.f32.mxu0 %v1192
    %1630 = vmatmul.mubr.f32.gmra.mrb[0].mxu0 %v1031
    %v1631 = vpop.f32.mrb[0].mxu0
    %v1632 = vadd.f32 0.0, %v1631
    %v1633 = vpop.f32.mrb[0].mxu0
    %1634 = vmatprep.mubr.f32.mxu0 %v1195
    %1635 = vmatmul.mubr.f32.gmra.mrb[0].mxu0 %v1033
    %v1636 = vpop.f32.mrb[0].mxu0
    %v1637 = vadd.f32 0.0, %v1636
    %v1638 = vpop.f32.mrb[0].mxu0
    %1639 = vmatprep.mubr.f32.mxu0 %v1198
    %1640 = vmatmul.mubr.f32.gmra.mrb[0].mxu0 %v1035
    %v1641 = vpop.f32.mrb[0].mxu0
    %v1642 = vadd.f32 0.0, %v1641
    %v1643 = vpop.f32.mrb[0].mxu0
    %1644 = vmatprep.mubr.f32.mxu0 %v1201
    %1645 = vmatmul.mubr.f32.gmra.mrb[0].mxu0 %v1037
    %v1646 = vpop.f32.mrb[0].mxu0
    %v1647 = vadd.f32 0.0, %v1646
    %v1648 = vpop.f32.mrb[0].mxu0
    %1649 = vmatprep.mubr.f32.mxu0 %v1204
    %1650 = vmatmul.mubr.f32.gmra.mrb[0].mxu0 %v1039
    %v1651 = vpop.f32.mrb[0].mxu0
    %v1652 = vadd.f32 0.0, %v1651
    %v1653 = vpop.f32.mrb[0].mxu0
    %1654 = vmatprep.mubr.f32.mxu0 %v1207
    %1655 = vmatmul.mubr.f32.gmra.mrb[0].mxu0 %v1041
    %v1656 = vpop.f32.mrb[0].mxu0
    %v1657 = vadd.f32 0.0, %v1656
    %v1658 = vpop.f32.mrb[0].mxu0
    %1659 = vmatprep.mubr.f32.mxu0 %v1210
    %1660 = vmatmul.mubr.f32.gmra.mrb[0].mxu0 %v1043
    %v1661 = vpop.f32.mrb[0].mxu0
    %v1662 = vadd.f32 0.0, %v1661
    %v1663 = vpop.f32.mrb[0].mxu0
    %1664 = vmatprep.mubr.f32.mxu0 %v1213
    %1665 = vmatmul.mubr.f32.gmra.mrb[0].mxu0 %v1045
    %v1666 = vpop.f32.mrb[0].mxu0
    %v1667 = vadd.f32 0.0, %v1666
    %v1668 = vpop.f32.mrb[0].mxu0
    %1669 = vmatprep.mubr.f32.mxu0 %v1216
    %1670 = vmatmul.mubr.f32.gmra.mrb[0].mxu0 %v1047
    %v1671 = vpop.f32.mrb[0].mxu0
    %v1672 = vadd.f32 0.0, %v1671
    %v1673 = vpop.f32.mrb[0].mxu0
    %1674 = vmatprep.mubr.f32.mxu0 %v1219
    %1675 = vmatmul.mubr.f32.gmra.mrb[0].mxu0 %v1049
    %v1676 = vpop.f32.mrb[0].mxu0
    %v1677 = vadd.f32 0.0, %v1676
    %v1678 = vpop.f32.mrb[0].mxu0
    %1679 = vmatprep.mubr.f32.mxu0 %v1222
    %1680 = vmatmul.mubr.f32.gmra.mrb[0].mxu0 %v1051
    %v1681 = vpop.f32.mrb[0].mxu0
    %v1682 = vadd.f32 0.0, %v1681
    %v1683 = vpop.f32.mrb[0].mxu0
    %1684 = vmatprep.mubr.f32.mxu0 %v1225
    %1685 = vmatmul.mubr.f32.gmra.mrb[0].mxu0 %v1053
    %v1686 = vpop.f32.mrb[0].mxu0
    %v1687 = vadd.f32 0.0, %v1686
    %v1688 = vpop.f32.mrb[0].mxu0
    %1689 = vmatprep.mubr.f32.mxu0 %v1228
    %1690 = vmatmul.mubr.f32.gmra.mrb[0].mxu0 %v1055
    %v1691 = vpop.f32.mrb[0].mxu0
    %v1692 = vadd.f32 0.0, %v1691
    %v1693 = vpop.f32.mrb[0].mxu0
    %1694 = vmatprep.mubr.f32.mxu0 %v1231
    %1695 = vmatmul.mubr.f32.gmra.mrb[0].mxu0 %v1057
    %v1696 = vpop.f32.mrb[0].mxu0
    %v1697 = vadd.f32 0.0, %v1696
    %v1698 = vpop.f32.mrb[0].mxu0
    %1699 = vdwg.mxu0
    %v1700 = vld [vmem:[%s7] sm:$0xff]
    %v1701 = vld [vmem:[%s7 + $0x8] sm:$0xff]
    %v1702 = vld [vmem:[%s7 + $0x10] sm:$0xff]
    %v1703 = vld [vmem:[%s7 + $0x18] sm:$0xff]
    %v1704 = vld [vmem:[%s7 + $0x20] sm:$0xff]
    %v1705 = vld [vmem:[%s7 + $0x28] sm:$0xff]
    %v1706 = vld [vmem:[%s7 + $0x30] sm:$0xff]
    %v1707 = vld [vmem:[%s7 + $0x38] sm:$0xff]
    %v1708 = vld [vmem:[%s7 + $0x40] sm:$0xff]
    %v1709 = vld [vmem:[%s7 + $0x48] sm:$0xff]
    %v1710 = vld [vmem:[%s7 + $0x50] sm:$0xff]
    %v1711 = vld [vmem:[%s7 + $0x58] sm:$0xff]
    %v1713 = vsel %vm729, %v669, 0
    %v1716 = vsel %vm729, %v670, 0
    %v1719 = vsel %vm729, %v671, 0
    %v1722 = vsel %vm729, %v672, 0
    %v1725 = vsel %vm729, %v673, 0
    %v1728 = vsel %vm729, %v674, 0
    %v1731 = vsel %vm729, %v675, 0
    %v1734 = vsel %vm729, %v676, 0
    %v1737 = vsel %vm729, %v677, 0
    %v1740 = vsel %vm729, %v678, 0
    %v1743 = vsel %vm729, %v679, 0
    %v1746 = vsel %vm729, %v680, 0
    %v1749 = vsel %vm729, %v681, 0
    %v1752 = vsel %vm729, %v682, 0
    %v1755 = vsel %vm729, %v683, 0
    %v1758 = vsel %vm729, %v684, 0
    %1760 = vmatprep.subr.mxu0 %v1701
    %1761 = vmatpush1.msra.mxu0 %v1700
    %1762 = vmatprep.subr.mxu0 %v1703
    %1763 = vmatpush1.msra.mxu0 %v1702
    %1764 = vmatprep.subr.mxu0 %v1705
    %1765 = vmatpush1.msra.mxu0 %v1704
    %1766 = vmatprep.subr.mxu0 %v1707
    %1767 = vmatpush1.msra.mxu0 %v1706
    %1768 = vmatprep.subr.mxu0 %v1709
    %1769 = vmatpush1.msra.mxu0 %v1708
    %1770 = vmatprep.subr.mxu0 %v1711
    %1771 = vmatpush1.msra.mxu0 %v1710
    %1772 = vmatprep.subr.mxu0 0.0
    %1773 = vmatpush1.msra.mxu0 0.0
    %1774 = vmatprep.subr.mxu0 0.0
    %1775 = vmatpush1.msra.mxu0 0.0
    %1776 = vmatprep.subr.mxu0 0.0
    %1777 = vmatpush1.msra.mxu0 0.0
    %1778 = vmatprep.subr.mxu0 0.0
    %1779 = vmatpush1.msra.mxu0 0.0
    %1780 = vmatprep.subr.mxu0 0.0
    %1781 = vmatpush1.msra.mxu0 0.0
    %1782 = vmatprep.subr.mxu0 0.0
    %1783 = vmatpush1.msra.mxu0 0.0
    %1784 = vmatprep.subr.mxu0 0.0
    %1785 = vmatpush1.msra.mxu0 0.0
    %1786 = vmatprep.subr.mxu0 0.0
    %1787 = vmatpush1.msra.mxu0 0.0
    %1788 = vmatprep.subr.mxu0 0.0
    %1789 = vmatpush1.msra.mxu0 0.0
    %1790 = vmatprep.subr.mxu0 0.0
    %1791 = vmatpush1.msra.mxu0 0.0
    %1792 = vmatprep.subr.mxu0 0.0
    %1793 = vmatpush1.msra.mxu0 0.0
    %1794 = vmatprep.subr.mxu0 0.0
    %1795 = vmatpush1.msra.mxu0 0.0
    %1796 = vmatprep.subr.mxu0 0.0
    %1797 = vmatpush1.msra.mxu0 0.0
    %1798 = vmatprep.subr.mxu0 0.0
    %1799 = vmatpush1.msra.mxu0 0.0
    %1800 = vmatprep.subr.mxu0 0.0
    %1801 = vmatpush1.msra.mxu0 0.0
    %1802 = vmatprep.subr.mxu0 0.0
    %1803 = vmatpush1.msra.mxu0 0.0
    %1804 = vmatprep.subr.mxu0 0.0
    %1805 = vmatpush1.msra.mxu0 0.0
    %1806 = vmatprep.subr.mxu0 0.0
    %1807 = vmatpush1.msra.mxu0 0.0
    %1808 = vmatprep.subr.mxu0 0.0
    %1809 = vmatpush1.msra.mxu0 0.0
    %1810 = vmatprep.subr.mxu0 0.0
    %1811 = vmatpush1.msra.mxu0 0.0
    %1812 = vmatprep.subr.mxu0 0.0
    %1813 = vmatpush1.msra.mxu0 0.0
    %1814 = vmatprep.subr.mxu0 0.0
    %1815 = vmatpush1.msra.mxu0 0.0
    %1816 = vmatprep.subr.mxu0 0.0
    %1817 = vmatpush1.msra.mxu0 0.0
    %1818 = vmatprep.subr.mxu0 0.0
    %1819 = vmatpush1.msra.mxu0 0.0
    %1820 = vmatprep.subr.mxu0 0.0
    %1821 = vmatpush1.msra.mxu0 0.0
    %1822 = vmatprep.subr.mxu0 0.0
    %1823 = vmatpush1.msra.mxu0 0.0
    %1824 = vmatprep.mubr.f32.mxu0 0.0
    %1825 = vmatmul.mubr.f32.gmra.mrb[0].mxu0 %v1713
    %v1826 = vpop.f32.mrb[0].mxu0
    %v1827 = vadd.f32 0.0, %v1826
    %v1828 = vpop.f32.mrb[0].mxu0
    %v1829 = vadd.f32 0.0, %v1828
    %1830 = vmatprep.mubr.f32.mxu0 0.0
    %1831 = vmatmul.mubr.f32.gmra.mrb[0].mxu0 %v1716
    %v1832 = vpop.f32.mrb[0].mxu0
    %v1833 = vadd.f32 0.0, %v1832
    %v1834 = vpop.f32.mrb[0].mxu0
    %v1835 = vadd.f32 0.0, %v1834
    %1836 = vmatprep.mubr.f32.mxu0 0.0
    %1837 = vmatmul.mubr.f32.gmra.mrb[0].mxu0 %v1719
    %v1838 = vpop.f32.mrb[0].mxu0
    %v1839 = vadd.f32 0.0, %v1838
    %v1840 = vpop.f32.mrb[0].mxu0
    %v1841 = vadd.f32 0.0, %v1840
    %1842 = vmatprep.mubr.f32.mxu0 0.0
    %1843 = vmatmul.mubr.f32.gmra.mrb[0].mxu0 %v1722
    %v1844 = vpop.f32.mrb[0].mxu0
    %v1845 = vadd.f32 0.0, %v1844
    %v1846 = vpop.f32.mrb[0].mxu0
    %v1847 = vadd.f32 0.0, %v1846
    %1848 = vmatprep.mubr.f32.mxu0 0.0
    %1849 = vmatmul.mubr.f32.gmra.mrb[0].mxu0 %v1725
    %v1850 = vpop.f32.mrb[0].mxu0
    %v1851 = vadd.f32 0.0, %v1850
    %v1852 = vpop.f32.mrb[0].mxu0
    %v1853 = vadd.f32 0.0, %v1852
    %1854 = vmatprep.mubr.f32.mxu0 0.0
    %1855 = vmatmul.mubr.f32.gmra.mrb[0].mxu0 %v1728
    %v1856 = vpop.f32.mrb[0].mxu0
    %v1857 = vadd.f32 0.0, %v1856
    %v1858 = vpop.f32.mrb[0].mxu0
    %v1859 = vadd.f32 0.0, %v1858
    %1860 = vmatprep.mubr.f32.mxu0 0.0
    %1861 = vmatmul.mubr.f32.gmra.mrb[0].mxu0 %v1731
    %v1862 = vpop.f32.mrb[0].mxu0
    %v1863 = vadd.f32 0.0, %v1862
    %v1864 = vpop.f32.mrb[0].mxu0
    %v1865 = vadd.f32 0.0, %v1864
    %1866 = vmatprep.mubr.f32.mxu0 0.0
    %1867 = vmatmul.mubr.f32.gmra.mrb[0].mxu0 %v1734
    %v1868 = vpop.f32.mrb[0].mxu0
    %v1869 = vadd.f32 0.0, %v1868
    %v1870 = vpop.f32.mrb[0].mxu0
    %v1871 = vadd.f32 0.0, %v1870
    %1872 = vmatprep.mubr.f32.mxu0 0.0
    %1873 = vmatmul.mubr.f32.gmra.mrb[0].mxu0 %v1737
    %v1874 = vpop.f32.mrb[0].mxu0
    %v1875 = vadd.f32 0.0, %v1874
    %v1876 = vpop.f32.mrb[0].mxu0
    %v1877 = vadd.f32 0.0, %v1876
    %1878 = vmatprep.mubr.f32.mxu0 0.0
    %1879 = vmatmul.mubr.f32.gmra.mrb[0].mxu0 %v1740
    %v1880 = vpop.f32.mrb[0].mxu0
    %v1881 = vadd.f32 0.0, %v1880
    %v1882 = vpop.f32.mrb[0].mxu0
    %v1883 = vadd.f32 0.0, %v1882
    %1884 = vmatprep.mubr.f32.mxu0 0.0
    %1885 = vmatmul.mubr.f32.gmra.mrb[0].mxu0 %v1743
    %v1886 = vpop.f32.mrb[0].mxu0
    %v1887 = vadd.f32 0.0, %v1886
    %v1888 = vpop.f32.mrb[0].mxu0
    %v1889 = vadd.f32 0.0, %v1888
    %1890 = vmatprep.mubr.f32.mxu0 0.0
    %1891 = vmatmul.mubr.f32.gmra.mrb[0].mxu0 %v1746
    %v1892 = vpop.f32.mrb[0].mxu0
    %v1893 = vadd.f32 0.0, %v1892
    %v1894 = vpop.f32.mrb[0].mxu0
    %v1895 = vadd.f32 0.0, %v1894
    %1896 = vmatprep.mubr.f32.mxu0 0.0
    %1897 = vmatmul.mubr.f32.gmra.mrb[0].mxu0 %v1749
    %v1898 = vpop.f32.mrb[0].mxu0
    %v1899 = vadd.f32 0.0, %v1898
    %v1900 = vpop.f32.mrb[0].mxu0
    %v1901 = vadd.f32 0.0, %v1900
    %1902 = vmatprep.mubr.f32.mxu0 0.0
    %1903 = vmatmul.mubr.f32.gmra.mrb[0].mxu0 %v1752
    %v1904 = vpop.f32.mrb[0].mxu0
    %v1905 = vadd.f32 0.0, %v1904
    %v1906 = vpop.f32.mrb[0].mxu0
    %v1907 = vadd.f32 0.0, %v1906
    %1908 = vmatprep.mubr.f32.mxu0 0.0
    %1909 = vmatmul.mubr.f32.gmra.mrb[0].mxu0 %v1755
    %v1910 = vpop.f32.mrb[0].mxu0
    %v1911 = vadd.f32 0.0, %v1910
    %v1912 = vpop.f32.mrb[0].mxu0
    %v1913 = vadd.f32 0.0, %v1912
    %1914 = vmatprep.mubr.f32.mxu0 0.0
    %1915 = vmatmul.mubr.f32.gmra.mrb[0].mxu0 %v1758
    %v1916 = vpop.f32.mrb[0].mxu0
    %v1917 = vadd.f32 0.0, %v1916
    %v1918 = vpop.f32.mrb[0].mxu0
    %v1919 = vadd.f32 0.0, %v1918
    %1920 = vdwg.mxu0
    %v1921 = vld [vmem:[%s8] sm:$0xff]
    %v1922 = vld [vmem:[%s8 + $0x8] sm:$0xff]
    %v1923 = vld [vmem:[%s8 + $0x10] sm:$0xff]
    %v1924 = vld [vmem:[%s8 + $0x18] sm:$0xff]
    %v1925 = vld [vmem:[%s8 + $0x20] sm:$0xff]
    %v1926 = vld [vmem:[%s8 + $0x28] sm:$0xff]
    %v1927 = vld [vmem:[%s8 + $0x30] sm:$0xff]
    %v1928 = vld [vmem:[%s8 + $0x38] sm:$0xff]
    %v1929 = vld [vmem:[%s8 + $0x40] sm:$0xff]
    %v1930 = vld [vmem:[%s8 + $0x48] sm:$0xff]
    %v1931 = vld [vmem:[%s8 + $0x50] sm:$0xff]
    %v1932 = vld [vmem:[%s8 + $0x58] sm:$0xff]
    %v1933 = vld [vmem:[%s8 + $0x60] sm:$0xff]
    %v1934 = vld [vmem:[%s8 + $0x68] sm:$0xff]
    %v1935 = vld [vmem:[%s8 + $0x70] sm:$0xff]
    %v1936 = vld [vmem:[%s8 + $0x78] sm:$0xff]
    %v1937 = vmul.f32 %v1827, %v1827
    %v1938 = vmul.f32 %v1833, %v1833
    %v1939 = vmul.f32 %v1839, %v1839
    %v1940 = vmul.f32 %v1845, %v1845
    %v1941 = vmul.f32 %v1851, %v1851
    %v1942 = vmul.f32 %v1857, %v1857
    %v1943 = vmul.f32 %v1863, %v1863
    %v1944 = vmul.f32 %v1869, %v1869
    %v1945 = vmul.f32 %v1875, %v1875
    %v1946 = vmul.f32 %v1881, %v1881
    %v1947 = vmul.f32 %v1887, %v1887
    %v1948 = vmul.f32 %v1893, %v1893
    %v1949 = vmul.f32 %v1899, %v1899
    %v1950 = vmul.f32 %v1905, %v1905
    %v1951 = vmul.f32 %v1911, %v1911
    %v1952 = vmul.f32 %v1917, %v1917
    %1953 = vmatprep.subr.mxu0 0.0
    %1954 = vmatpush1.msra.mxu0 %v1921
    %1955 = vmatprep.subr.mxu0 0.0
    %1956 = vmatpush1.msra.mxu0 %v1922
    %1957 = vmatprep.subr.mxu0 0.0
    %1958 = vmatpush1.msra.mxu0 %v1923
    %1959 = vmatprep.subr.mxu0 0.0
    %1960 = vmatpush1.msra.mxu0 %v1924
    %1961 = vmatprep.subr.mxu0 0.0
    %1962 = vmatpush1.msra.mxu0 %v1925
    %1963 = vmatprep.subr.mxu0 0.0
    %1964 = vmatpush1.msra.mxu0 %v1926
    %1965 = vmatprep.subr.mxu0 0.0
    %1966 = vmatpush1.msra.mxu0 %v1927
    %1967 = vmatprep.subr.mxu0 0.0
    %1968 = vmatpush1.msra.mxu0 %v1928
    %1969 = vmatprep.subr.mxu0 0.0
    %1970 = vmatpush1.msra.mxu0 %v1929
    %1971 = vmatprep.subr.mxu0 0.0
    %1972 = vmatpush1.msra.mxu0 %v1930
    %1973 = vmatprep.subr.mxu0 0.0
    %1974 = vmatpush1.msra.mxu0 %v1931
    %1975 = vmatprep.subr.mxu0 0.0
    %1976 = vmatpush1.msra.mxu0 %v1932
    %1977 = vmatprep.subr.mxu0 0.0
    %1978 = vmatpush1.msra.mxu0 %v1933
    %1979 = vmatprep.subr.mxu0 0.0
    %1980 = vmatpush1.msra.mxu0 %v1934
    %1981 = vmatprep.subr.mxu0 0.0
    %1982 = vmatpush1.msra.mxu0 %v1935
    %1983 = vmatprep.subr.mxu0 0.0
    %1984 = vmatpush1.msra.mxu0 %v1936
    %1985 = vmatprep.subr.mxu0 0.0
    %1986 = vmatpush1.msra.mxu0 0.0
    %1987 = vmatprep.subr.mxu0 0.0
    %1988 = vmatpush1.msra.mxu0 0.0
    %1989 = vmatprep.subr.mxu0 0.0
    %1990 = vmatpush1.msra.mxu0 0.0
    %1991 = vmatprep.subr.mxu0 0.0
    %1992 = vmatpush1.msra.mxu0 0.0
    %1993 = vmatprep.subr.mxu0 0.0
    %1994 = vmatpush1.msra.mxu0 0.0
    %1995 = vmatprep.subr.mxu0 0.0
    %1996 = vmatpush1.msra.mxu0 0.0
    %1997 = vmatprep.subr.mxu0 0.0
    %1998 = vmatpush1.msra.mxu0 0.0
    %1999 = vmatprep.subr.mxu0 0.0
    %2000 = vmatpush1.msra.mxu0 0.0
    %2001 = vmatprep.subr.mxu0 0.0
    %2002 = vmatpush1.msra.mxu0 0.0
    %2003 = vmatprep.subr.mxu0 0.0
    %2004 = vmatpush1.msra.mxu0 0.0
    %2005 = vmatprep.subr.mxu0 0.0
    %2006 = vmatpush1.msra.mxu0 0.0
    %2007 = vmatprep.subr.mxu0 0.0
    %2008 = vmatpush1.msra.mxu0 0.0
    %2009 = vmatprep.subr.mxu0 0.0
    %2010 = vmatpush1.msra.mxu0 0.0
    %2011 = vmatprep.subr.mxu0 0.0
    %2012 = vmatpush1.msra.mxu0 0.0
    %2013 = vmatprep.subr.mxu0 0.0
    %2014 = vmatpush1.msra.mxu0 0.0
    %2015 = vmatprep.subr.mxu0 0.0
    %2016 = vmatpush1.msra.mxu0 0.0
    %2017 = vmatprep.mubr.f32.mxu0 0.0
    %2018 = vmatmul.mubr.f32.gmra.mrb[0].mxu0 %v1937
    %v2019 = vpop.f32.mrb[0].mxu0
    %v2020 = vadd.f32 0.0, %v2019
    %v2021 = vpop.f32.mrb[0].mxu0
    %2022 = vmatprep.mubr.f32.mxu0 0.0
    %2023 = vmatmul.mubr.f32.gmra.mrb[0].mxu0 %v1938
    %v2024 = vpop.f32.mrb[0].mxu0
    %v2025 = vadd.f32 0.0, %v2024
    %v2026 = vpop.f32.mrb[0].mxu0
    %2027 = vmatprep.mubr.f32.mxu0 0.0
    %2028 = vmatmul.mubr.f32.gmra.mrb[0].mxu0 %v1939
    %v2029 = vpop.f32.mrb[0].mxu0
    %v2030 = vadd.f32 0.0, %v2029
    %v2031 = vpop.f32.mrb[0].mxu0
    %2032 = vmatprep.mubr.f32.mxu0 0.0
    %2033 = vmatmul.mubr.f32.gmra.mrb[0].mxu0 %v1940
    %v2034 = vpop.f32.mrb[0].mxu0
    %v2035 = vadd.f32 0.0, %v2034
    %v2036 = vpop.f32.mrb[0].mxu0
    %2037 = vmatprep.mubr.f32.mxu0 0.0
    %2038 = vmatmul.mubr.f32.gmra.mrb[0].mxu0 %v1941
    %v2039 = vpop.f32.mrb[0].mxu0
    %v2040 = vadd.f32 0.0, %v2039
    %v2041 = vpop.f32.mrb[0].mxu0
    %2042 = vmatprep.mubr.f32.mxu0 0.0
    %2043 = vmatmul.mubr.f32.gmra.mrb[0].mxu0 %v1942
    %v2044 = vpop.f32.mrb[0].mxu0
    %v2045 = vadd.f32 0.0, %v2044
    %v2046 = vpop.f32.mrb[0].mxu0
    %2047 = vmatprep.mubr.f32.mxu0 0.0
    %2048 = vmatmul.mubr.f32.gmra.mrb[0].mxu0 %v1943
    %v2049 = vpop.f32.mrb[0].mxu0
    %v2050 = vadd.f32 0.0, %v2049
    %v2051 = vpop.f32.mrb[0].mxu0
    %2052 = vmatprep.mubr.f32.mxu0 0.0
    %2053 = vmatmul.mubr.f32.gmra.mrb[0].mxu0 %v1944
    %v2054 = vpop.f32.mrb[0].mxu0
    %v2055 = vadd.f32 0.0, %v2054
    %v2056 = vpop.f32.mrb[0].mxu0
    %2057 = vmatprep.mubr.f32.mxu0 0.0
    %2058 = vmatmul.mubr.f32.gmra.mrb[0].mxu0 %v1945
    %v2059 = vpop.f32.mrb[0].mxu0
    %v2060 = vadd.f32 0.0, %v2059
    %v2061 = vpop.f32.mrb[0].mxu0
    %2062 = vmatprep.mubr.f32.mxu0 0.0
    %2063 = vmatmul.mubr.f32.gmra.mrb[0].mxu0 %v1946
    %v2064 = vpop.f32.mrb[0].mxu0
    %v2065 = vadd.f32 0.0, %v2064
    %v2066 = vpop.f32.mrb[0].mxu0
    %2067 = vmatprep.mubr.f32.mxu0 0.0
    %2068 = vmatmul.mubr.f32.gmra.mrb[0].mxu0 %v1947
    %v2069 = vpop.f32.mrb[0].mxu0
    %v2070 = vadd.f32 0.0, %v2069
    %v2071 = vpop.f32.mrb[0].mxu0
    %2072 = vmatprep.mubr.f32.mxu0 0.0
    %2073 = vmatmul.mubr.f32.gmra.mrb[0].mxu0 %v1948
    %v2074 = vpop.f32.mrb[0].mxu0
    %v2075 = vadd.f32 0.0, %v2074
    %v2076 = vpop.f32.mrb[0].mxu0
    %2077 = vmatprep.mubr.f32.mxu0 0.0
    %2078 = vmatmul.mubr.f32.gmra.mrb[0].mxu0 %v1949
    %v2079 = vpop.f32.mrb[0].mxu0
    %v2080 = vadd.f32 0.0, %v2079
    %v2081 = vpop.f32.mrb[0].mxu0
    %2082 = vmatprep.mubr.f32.mxu0 0.0
    %2083 = vmatmul.mubr.f32.gmra.mrb[0].mxu0 %v1950
    %v2084 = vpop.f32.mrb[0].mxu0
    %v2085 = vadd.f32 0.0, %v2084
    %v2086 = vpop.f32.mrb[0].mxu0
    %2087 = vmatprep.mubr.f32.mxu0 0.0
    %2088 = vmatmul.mubr.f32.gmra.mrb[0].mxu0 %v1951
    %v2089 = vpop.f32.mrb[0].mxu0
    %v2090 = vadd.f32 0.0, %v2089
    %v2091 = vpop.f32.mrb[0].mxu0
    %2092 = vmatprep.mubr.f32.mxu0 0.0
    %2093 = vmatmul.mubr.f32.gmra.mrb[0].mxu0 %v1952
    %v2094 = vpop.f32.mrb[0].mxu0
    %v2095 = vadd.f32 0.0, %v2094
    %v2096 = vpop.f32.mrb[0].mxu0
    %2097 = vdwg.mxu0
    %v2098 = vmul.f32 %v1827, %v1829
    %v2099 = vmul.f32 %v1833, %v1835
    %v2100 = vmul.f32 %v1839, %v1841
    %v2101 = vmul.f32 %v1845, %v1847
    %v2102 = vmul.f32 %v1851, %v1853
    %v2103 = vmul.f32 %v1857, %v1859
    %v2104 = vmul.f32 %v1863, %v1865
    %v2105 = vmul.f32 %v1869, %v1871
    %v2106 = vmul.f32 %v1875, %v1877
    %v2107 = vmul.f32 %v1881, %v1883
    %v2108 = vmul.f32 %v1887, %v1889
    %v2109 = vmul.f32 %v1893, %v1895
    %v2110 = vmul.f32 %v1899, %v1901
    %v2111 = vmul.f32 %v1905, %v1907
    %v2112 = vmul.f32 %v1911, %v1913
    %v2113 = vmul.f32 %v1917, %v1919
    %2114 = vmatprep.subr.mxu0 0.0
    %2115 = vmatpush1.msra.mxu0 %v1921
    %2116 = vmatprep.subr.mxu0 0.0
    %2117 = vmatpush1.msra.mxu0 %v1922
    %2118 = vmatprep.subr.mxu0 0.0
    %2119 = vmatpush1.msra.mxu0 %v1923
    %2120 = vmatprep.subr.mxu0 0.0
    %2121 = vmatpush1.msra.mxu0 %v1924
    %2122 = vmatprep.subr.mxu0 0.0
    %2123 = vmatpush1.msra.mxu0 %v1925
    %2124 = vmatprep.subr.mxu0 0.0
    %2125 = vmatpush1.msra.mxu0 %v1926
    %2126 = vmatprep.subr.mxu0 0.0
    %2127 = vmatpush1.msra.mxu0 %v1927
    %2128 = vmatprep.subr.mxu0 0.0
    %2129 = vmatpush1.msra.mxu0 %v1928
    %2130 = vmatprep.subr.mxu0 0.0
    %2131 = vmatpush1.msra.mxu0 %v1929
    %2132 = vmatprep.subr.mxu0 0.0
    %2133 = vmatpush1.msra.mxu0 %v1930
    %2134 = vmatprep.subr.mxu0 0.0
    %2135 = vmatpush1.msra.mxu0 %v1931
    %2136 = vmatprep.subr.mxu0 0.0
    %2137 = vmatpush1.msra.mxu0 %v1932
    %2138 = vmatprep.subr.mxu0 0.0
    %2139 = vmatpush1.msra.mxu0 %v1933
    %2140 = vmatprep.subr.mxu0 0.0
    %2141 = vmatpush1.msra.mxu0 %v1934
    %2142 = vmatprep.subr.mxu0 0.0
    %2143 = vmatpush1.msra.mxu0 %v1935
    %2144 = vmatprep.subr.mxu0 0.0
    %2145 = vmatpush1.msra.mxu0 %v1936
    %2146 = vmatprep.subr.mxu0 0.0
    %2147 = vmatpush1.msra.mxu0 0.0
    %2148 = vmatprep.subr.mxu0 0.0
    %2149 = vmatpush1.msra.mxu0 0.0
    %2150 = vmatprep.subr.mxu0 0.0
    %2151 = vmatpush1.msra.mxu0 0.0
    %2152 = vmatprep.subr.mxu0 0.0
    %2153 = vmatpush1.msra.mxu0 0.0
    %2154 = vmatprep.subr.mxu0 0.0
    %2155 = vmatpush1.msra.mxu0 0.0
    %2156 = vmatprep.subr.mxu0 0.0
    %2157 = vmatpush1.msra.mxu0 0.0
    %2158 = vmatprep.subr.mxu0 0.0
    %2159 = vmatpush1.msra.mxu0 0.0
    %2160 = vmatprep.subr.mxu0 0.0
    %2161 = vmatpush1.msra.mxu0 0.0
    %2162 = vmatprep.subr.mxu0 0.0
    %2163 = vmatpush1.msra.mxu0 0.0
    %2164 = vmatprep.subr.mxu0 0.0
    %2165 = vmatpush1.msra.mxu0 0.0
    %2166 = vmatprep.subr.mxu0 0.0
    %2167 = vmatpush1.msra.mxu0 0.0
    %2168 = vmatprep.subr.mxu0 0.0
    %2169 = vmatpush1.msra.mxu0 0.0
    %2170 = vmatprep.subr.mxu0 0.0
    %2171 = vmatpush1.msra.mxu0 0.0
    %2172 = vmatprep.subr.mxu0 0.0
    %2173 = vmatpush1.msra.mxu0 0.0
    %2174 = vmatprep.subr.mxu0 0.0
    %2175 = vmatpush1.msra.mxu0 0.0
    %2176 = vmatprep.subr.mxu0 0.0
    %2177 = vmatpush1.msra.mxu0 0.0
    %2178 = vmatprep.mubr.f32.mxu0 0.0
    %2179 = vmatmul.mubr.f32.gmra.mrb[0].mxu0 %v2098
    %v2180 = vpop.f32.mrb[0].mxu0
    %v2181 = vadd.f32 0.0, %v2180
    %v2182 = vpop.f32.mrb[0].mxu0
    %2183 = vmatprep.mubr.f32.mxu0 0.0
    %2184 = vmatmul.mubr.f32.gmra.mrb[0].mxu0 %v2099
    %v2185 = vpop.f32.mrb[0].mxu0
    %v2186 = vadd.f32 0.0, %v2185
    %v2187 = vpop.f32.mrb[0].mxu0
    %2188 = vmatprep.mubr.f32.mxu0 0.0
    %2189 = vmatmul.mubr.f32.gmra.mrb[0].mxu0 %v2100
    %v2190 = vpop.f32.mrb[0].mxu0
    %v2191 = vadd.f32 0.0, %v2190
    %v2192 = vpop.f32.mrb[0].mxu0
    %2193 = vmatprep.mubr.f32.mxu0 0.0
    %2194 = vmatmul.mubr.f32.gmra.mrb[0].mxu0 %v2101
    %v2195 = vpop.f32.mrb[0].mxu0
    %v2196 = vadd.f32 0.0, %v2195
    %v2197 = vpop.f32.mrb[0].mxu0
    %2198 = vmatprep.mubr.f32.mxu0 0.0
    %2199 = vmatmul.mubr.f32.gmra.mrb[0].mxu0 %v2102
    %v2200 = vpop.f32.mrb[0].mxu0
    %v2201 = vadd.f32 0.0, %v2200
    %v2202 = vpop.f32.mrb[0].mxu0
    %2203 = vmatprep.mubr.f32.mxu0 0.0
    %2204 = vmatmul.mubr.f32.gmra.mrb[0].mxu0 %v2103
    %v2205 = vpop.f32.mrb[0].mxu0
    %v2206 = vadd.f32 0.0, %v2205
    %v2207 = vpop.f32.mrb[0].mxu0
    %2208 = vmatprep.mubr.f32.mxu0 0.0
    %2209 = vmatmul.mubr.f32.gmra.mrb[0].mxu0 %v2104
    %v2210 = vpop.f32.mrb[0].mxu0
    %v2211 = vadd.f32 0.0, %v2210
    %v2212 = vpop.f32.mrb[0].mxu0
    %2213 = vmatprep.mubr.f32.mxu0 0.0
    %2214 = vmatmul.mubr.f32.gmra.mrb[0].mxu0 %v2105
    %v2215 = vpop.f32.mrb[0].mxu0
    %v2216 = vadd.f32 0.0, %v2215
    %v2217 = vpop.f32.mrb[0].mxu0
    %2218 = vmatprep.mubr.f32.mxu0 0.0
    %2219 = vmatmul.mubr.f32.gmra.mrb[0].mxu0 %v2106
    %v2220 = vpop.f32.mrb[0].mxu0
    %v2221 = vadd.f32 0.0, %v2220
    %v2222 = vpop.f32.mrb[0].mxu0
    %2223 = vmatprep.mubr.f32.mxu0 0.0
    %2224 = vmatmul.mubr.f32.gmra.mrb[0].mxu0 %v2107
    %v2225 = vpop.f32.mrb[0].mxu0
    %v2226 = vadd.f32 0.0, %v2225
    %v2227 = vpop.f32.mrb[0].mxu0
    %2228 = vmatprep.mubr.f32.mxu0 0.0
    %2229 = vmatmul.mubr.f32.gmra.mrb[0].mxu0 %v2108
    %v2230 = vpop.f32.mrb[0].mxu0
    %v2231 = vadd.f32 0.0, %v2230
    %v2232 = vpop.f32.mrb[0].mxu0
    %2233 = vmatprep.mubr.f32.mxu0 0.0
    %2234 = vmatmul.mubr.f32.gmra.mrb[0].mxu0 %v2109
    %v2235 = vpop.f32.mrb[0].mxu0
    %v2236 = vadd.f32 0.0, %v2235
    %v2237 = vpop.f32.mrb[0].mxu0
    %2238 = vmatprep.mubr.f32.mxu0 0.0
    %2239 = vmatmul.mubr.f32.gmra.mrb[0].mxu0 %v2110
    %v2240 = vpop.f32.mrb[0].mxu0
    %v2241 = vadd.f32 0.0, %v2240
    %v2242 = vpop.f32.mrb[0].mxu0
    %2243 = vmatprep.mubr.f32.mxu0 0.0
    %2244 = vmatmul.mubr.f32.gmra.mrb[0].mxu0 %v2111
    %v2245 = vpop.f32.mrb[0].mxu0
    %v2246 = vadd.f32 0.0, %v2245
    %v2247 = vpop.f32.mrb[0].mxu0
    %2248 = vmatprep.mubr.f32.mxu0 0.0
    %2249 = vmatmul.mubr.f32.gmra.mrb[0].mxu0 %v2112
    %v2250 = vpop.f32.mrb[0].mxu0
    %v2251 = vadd.f32 0.0, %v2250
    %v2252 = vpop.f32.mrb[0].mxu0
    %2253 = vmatprep.mubr.f32.mxu0 0.0
    %2254 = vmatmul.mubr.f32.gmra.mrb[0].mxu0 %v2113
    %v2255 = vpop.f32.mrb[0].mxu0
    %v2256 = vadd.f32 0.0, %v2255
    %v2257 = vpop.f32.mrb[0].mxu0
    %2258 = vdwg.mxu0
    %v2259 = vmul.f32 %v1829, %v1829
    %v2260 = vmul.f32 %v1835, %v1835
    %v2261 = vmul.f32 %v1841, %v1841
    %v2262 = vmul.f32 %v1847, %v1847
    %v2263 = vmul.f32 %v1853, %v1853
    %v2264 = vmul.f32 %v1859, %v1859
    %v2265 = vmul.f32 %v1865, %v1865
    %v2266 = vmul.f32 %v1871, %v1871
    %v2267 = vmul.f32 %v1877, %v1877
    %v2268 = vmul.f32 %v1883, %v1883
    %v2269 = vmul.f32 %v1889, %v1889
    %v2270 = vmul.f32 %v1895, %v1895
    %v2271 = vmul.f32 %v1901, %v1901
    %v2272 = vmul.f32 %v1907, %v1907
    %v2273 = vmul.f32 %v1913, %v1913
    %v2274 = vmul.f32 %v1919, %v1919
    %2275 = vmatprep.subr.mxu0 0.0
    %2276 = vmatpush1.msra.mxu0 %v1921
    %2277 = vmatprep.subr.mxu0 0.0
    %2278 = vmatpush1.msra.mxu0 %v1922
    %2279 = vmatprep.subr.mxu0 0.0
    %2280 = vmatpush1.msra.mxu0 %v1923
    %2281 = vmatprep.subr.mxu0 0.0
    %2282 = vmatpush1.msra.mxu0 %v1924
    %2283 = vmatprep.subr.mxu0 0.0
    %2284 = vmatpush1.msra.mxu0 %v1925
    %2285 = vmatprep.subr.mxu0 0.0
    %2286 = vmatpush1.msra.mxu0 %v1926
    %2287 = vmatprep.subr.mxu0 0.0
    %2288 = vmatpush1.msra.mxu0 %v1927
    %2289 = vmatprep.subr.mxu0 0.0
    %2290 = vmatpush1.msra.mxu0 %v1928
    %2291 = vmatprep.subr.mxu0 0.0
    %2292 = vmatpush1.msra.mxu0 %v1929
    %2293 = vmatprep.subr.mxu0 0.0
    %2294 = vmatpush1.msra.mxu0 %v1930
    %2295 = vmatprep.subr.mxu0 0.0
    %2296 = vmatpush1.msra.mxu0 %v1931
    %2297 = vmatprep.subr.mxu0 0.0
    %2298 = vmatpush1.msra.mxu0 %v1932
    %2299 = vmatprep.subr.mxu0 0.0
    %2300 = vmatpush1.msra.mxu0 %v1933
    %2301 = vmatprep.subr.mxu0 0.0
    %2302 = vmatpush1.msra.mxu0 %v1934
    %2303 = vmatprep.subr.mxu0 0.0
    %2304 = vmatpush1.msra.mxu0 %v1935
    %2305 = vmatprep.subr.mxu0 0.0
    %2306 = vmatpush1.msra.mxu0 %v1936
    %2307 = vmatprep.subr.mxu0 0.0
    %2308 = vmatpush1.msra.mxu0 0.0
    %2309 = vmatprep.subr.mxu0 0.0
    %2310 = vmatpush1.msra.mxu0 0.0
    %2311 = vmatprep.subr.mxu0 0.0
    %2312 = vmatpush1.msra.mxu0 0.0
    %2313 = vmatprep.subr.mxu0 0.0
    %2314 = vmatpush1.msra.mxu0 0.0
    %2315 = vmatprep.subr.mxu0 0.0
    %2316 = vmatpush1.msra.mxu0 0.0
    %2317 = vmatprep.subr.mxu0 0.0
    %2318 = vmatpush1.msra.mxu0 0.0
    %2319 = vmatprep.subr.mxu0 0.0
    %2320 = vmatpush1.msra.mxu0 0.0
    %2321 = vmatprep.subr.mxu0 0.0
    %2322 = vmatpush1.msra.mxu0 0.0
    %2323 = vmatprep.subr.mxu0 0.0
    %2324 = vmatpush1.msra.mxu0 0.0
    %2325 = vmatprep.subr.mxu0 0.0
    %2326 = vmatpush1.msra.mxu0 0.0
    %2327 = vmatprep.subr.mxu0 0.0
    %2328 = vmatpush1.msra.mxu0 0.0
    %2329 = vmatprep.subr.mxu0 0.0
    %2330 = vmatpush1.msra.mxu0 0.0
    %2331 = vmatprep.subr.mxu0 0.0
    %2332 = vmatpush1.msra.mxu0 0.0
    %2333 = vmatprep.subr.mxu0 0.0
    %2334 = vmatpush1.msra.mxu0 0.0
    %2335 = vmatprep.subr.mxu0 0.0
    %2336 = vmatpush1.msra.mxu0 0.0
    %2337 = vmatprep.subr.mxu0 0.0
    %2338 = vmatpush1.msra.mxu0 0.0
    %2339 = vmatprep.mubr.f32.mxu0 0.0
    %2340 = vmatmul.mubr.f32.gmra.mrb[0].mxu0 %v2259
    %v2341 = vpop.f32.mrb[0].mxu0
    %v2342 = vadd.f32 0.0, %v2341
    %v2343 = vpop.f32.mrb[0].mxu0
    %2344 = vmatprep.mubr.f32.mxu0 0.0
    %2345 = vmatmul.mubr.f32.gmra.mrb[0].mxu0 %v2260
    %v2346 = vpop.f32.mrb[0].mxu0
    %v2347 = vadd.f32 0.0, %v2346
    %v2348 = vpop.f32.mrb[0].mxu0
    %2349 = vmatprep.mubr.f32.mxu0 0.0
    %2350 = vmatmul.mubr.f32.gmra.mrb[0].mxu0 %v2261
    %v2351 = vpop.f32.mrb[0].mxu0
    %v2352 = vadd.f32 0.0, %v2351
    %v2353 = vpop.f32.mrb[0].mxu0
    %2354 = vmatprep.mubr.f32.mxu0 0.0
    %2355 = vmatmul.mubr.f32.gmra.mrb[0].mxu0 %v2262
    %v2356 = vpop.f32.mrb[0].mxu0
    %v2357 = vadd.f32 0.0, %v2356
    %v2358 = vpop.f32.mrb[0].mxu0
    %2359 = vmatprep.mubr.f32.mxu0 0.0
    %2360 = vmatmul.mubr.f32.gmra.mrb[0].mxu0 %v2263
    %v2361 = vpop.f32.mrb[0].mxu0
    %v2362 = vadd.f32 0.0, %v2361
    %v2363 = vpop.f32.mrb[0].mxu0
    %2364 = vmatprep.mubr.f32.mxu0 0.0
    %2365 = vmatmul.mubr.f32.gmra.mrb[0].mxu0 %v2264
    %v2366 = vpop.f32.mrb[0].mxu0
    %v2367 = vadd.f32 0.0, %v2366
    %v2368 = vpop.f32.mrb[0].mxu0
    %2369 = vmatprep.mubr.f32.mxu0 0.0
    %2370 = vmatmul.mubr.f32.gmra.mrb[0].mxu0 %v2265
    %v2371 = vpop.f32.mrb[0].mxu0
    %v2372 = vadd.f32 0.0, %v2371
    %v2373 = vpop.f32.mrb[0].mxu0
    %2374 = vmatprep.mubr.f32.mxu0 0.0
    %2375 = vmatmul.mubr.f32.gmra.mrb[0].mxu0 %v2266
    %v2376 = vpop.f32.mrb[0].mxu0
    %v2377 = vadd.f32 0.0, %v2376
    %v2378 = vpop.f32.mrb[0].mxu0
    %2379 = vmatprep.mubr.f32.mxu0 0.0
    %2380 = vmatmul.mubr.f32.gmra.mrb[0].mxu0 %v2267
    %v2381 = vpop.f32.mrb[0].mxu0
    %v2382 = vadd.f32 0.0, %v2381
    %v2383 = vpop.f32.mrb[0].mxu0
    %2384 = vmatprep.mubr.f32.mxu0 0.0
    %2385 = vmatmul.mubr.f32.gmra.mrb[0].mxu0 %v2268
    %v2386 = vpop.f32.mrb[0].mxu0
    %v2387 = vadd.f32 0.0, %v2386
    %v2388 = vpop.f32.mrb[0].mxu0
    %2389 = vmatprep.mubr.f32.mxu0 0.0
    %2390 = vmatmul.mubr.f32.gmra.mrb[0].mxu0 %v2269
    %v2391 = vpop.f32.mrb[0].mxu0
    %v2392 = vadd.f32 0.0, %v2391
    %v2393 = vpop.f32.mrb[0].mxu0
    %2394 = vmatprep.mubr.f32.mxu0 0.0
    %2395 = vmatmul.mubr.f32.gmra.mrb[0].mxu0 %v2270
    %v2396 = vpop.f32.mrb[0].mxu0
    %v2397 = vadd.f32 0.0, %v2396
    %v2398 = vpop.f32.mrb[0].mxu0
    %2399 = vmatprep.mubr.f32.mxu0 0.0
    %2400 = vmatmul.mubr.f32.gmra.mrb[0].mxu0 %v2271
    %v2401 = vpop.f32.mrb[0].mxu0
    %v2402 = vadd.f32 0.0, %v2401
    %v2403 = vpop.f32.mrb[0].mxu0
    %2404 = vmatprep.mubr.f32.mxu0 0.0
    %2405 = vmatmul.mubr.f32.gmra.mrb[0].mxu0 %v2272
    %v2406 = vpop.f32.mrb[0].mxu0
    %v2407 = vadd.f32 0.0, %v2406
    %v2408 = vpop.f32.mrb[0].mxu0
    %2409 = vmatprep.mubr.f32.mxu0 0.0
    %2410 = vmatmul.mubr.f32.gmra.mrb[0].mxu0 %v2273
    %v2411 = vpop.f32.mrb[0].mxu0
    %v2412 = vadd.f32 0.0, %v2411
    %v2413 = vpop.f32.mrb[0].mxu0
    %2414 = vmatprep.mubr.f32.mxu0 0.0
    %2415 = vmatmul.mubr.f32.gmra.mrb[0].mxu0 %v2274
    %v2416 = vpop.f32.mrb[0].mxu0
    %v2417 = vadd.f32 0.0, %v2416
    %v2418 = vpop.f32.mrb[0].mxu0
    %2419 = vdwg.mxu0
    %v2420 = vmul.f32 %v1300, %v2020
    %v2421 = vmul.f32 %v1306, %v2025
    %v2422 = vmul.f32 %v1312, %v2030
    %v2423 = vmul.f32 %v1318, %v2035
    %v2424 = vmul.f32 %v1324, %v2040
    %v2425 = vmul.f32 %v1330, %v2045
    %v2426 = vmul.f32 %v1336, %v2050
    %v2427 = vmul.f32 %v1342, %v2055
    %v2428 = vmul.f32 %v1348, %v2060
    %v2429 = vmul.f32 %v1354, %v2065
    %v2430 = vmul.f32 %v1360, %v2070
    %v2431 = vmul.f32 %v1366, %v2075
    %v2432 = vmul.f32 %v1372, %v2080
    %v2433 = vmul.f32 %v1378, %v2085
    %v2434 = vmul.f32 %v1384, %v2090
    %v2435 = vmul.f32 %v1390, %v2095
    %v2436 = vadd.f32 %v1302, %v1461
    %v2437 = vadd.f32 %v1308, %v1467
    %v2438 = vadd.f32 %v1314, %v1473
    %v2439 = vadd.f32 %v1320, %v1479
    %v2440 = vadd.f32 %v1326, %v1485
    %v2441 = vadd.f32 %v1332, %v1491
    %v2442 = vadd.f32 %v1338, %v1497
    %v2443 = vadd.f32 %v1344, %v1503
    %v2444 = vadd.f32 %v1350, %v1509
    %v2445 = vadd.f32 %v1356, %v1515
    %v2446 = vadd.f32 %v1362, %v1521
    %v2447 = vadd.f32 %v1368, %v1527
    %v2448 = vadd.f32 %v1374, %v1533
    %v2449 = vadd.f32 %v1380, %v1539
    %v2450 = vadd.f32 %v1386, %v1545
    %v2451 = vadd.f32 %v1392, %v1551
    %v2452 = vmul.f32 %v2436, %v2181
    %v2453 = vmul.f32 %v2437, %v2186
    %v2454 = vmul.f32 %v2438, %v2191
    %v2455 = vmul.f32 %v2439, %v2196
    %v2456 = vmul.f32 %v2440, %v2201
    %v2457 = vmul.f32 %v2441, %v2206
    %v2458 = vmul.f32 %v2442, %v2211
    %v2459 = vmul.f32 %v2443, %v2216
    %v2460 = vmul.f32 %v2444, %v2221
    %v2461 = vmul.f32 %v2445, %v2226
    %v2462 = vmul.f32 %v2446, %v2231
    %v2463 = vmul.f32 %v2447, %v2236
    %v2464 = vmul.f32 %v2448, %v2241
    %v2465 = vmul.f32 %v2449, %v2246
    %v2466 = vmul.f32 %v2450, %v2251
    %v2467 = vmul.f32 %v2451, %v2256
    %v2468 = vadd.f32 %v2420, %v2452
    %v2469 = vadd.f32 %v2421, %v2453
    %v2470 = vadd.f32 %v2422, %v2454
    %v2471 = vadd.f32 %v2423, %v2455
    %v2472 = vadd.f32 %v2424, %v2456
    %v2473 = vadd.f32 %v2425, %v2457
    %v2474 = vadd.f32 %v2426, %v2458
    %v2475 = vadd.f32 %v2427, %v2459
    %v2476 = vadd.f32 %v2428, %v2460
    %v2477 = vadd.f32 %v2429, %v2461
    %v2478 = vadd.f32 %v2430, %v2462
    %v2479 = vadd.f32 %v2431, %v2463
    %v2480 = vadd.f32 %v2432, %v2464
    %v2481 = vadd.f32 %v2433, %v2465
    %v2482 = vadd.f32 %v2434, %v2466
    %v2483 = vadd.f32 %v2435, %v2467
    %v2484 = vmul.f32 %v1463, %v2342
    %v2485 = vmul.f32 %v1469, %v2347
    %v2486 = vmul.f32 %v1475, %v2352
    %v2487 = vmul.f32 %v1481, %v2357
    %v2488 = vmul.f32 %v1487, %v2362
    %v2489 = vmul.f32 %v1493, %v2367
    %v2490 = vmul.f32 %v1499, %v2372
    %v2491 = vmul.f32 %v1505, %v2377
    %v2492 = vmul.f32 %v1511, %v2382
    %v2493 = vmul.f32 %v1517, %v2387
    %v2494 = vmul.f32 %v1523, %v2392
    %v2495 = vmul.f32 %v1529, %v2397
    %v2496 = vmul.f32 %v1535, %v2402
    %v2497 = vmul.f32 %v1541, %v2407
    %v2498 = vmul.f32 %v1547, %v2412
    %v2499 = vmul.f32 %v1553, %v2417
    %v2500 = vadd.f32 %v2468, %v2484
    %v2501 = vadd.f32 %v2469, %v2485
    %v2502 = vadd.f32 %v2470, %v2486
    %v2503 = vadd.f32 %v2471, %v2487
    %v2504 = vadd.f32 %v2472, %v2488
    %v2505 = vadd.f32 %v2473, %v2489
    %v2506 = vadd.f32 %v2474, %v2490
    %v2507 = vadd.f32 %v2475, %v2491
    %v2508 = vadd.f32 %v2476, %v2492
    %v2509 = vadd.f32 %v2477, %v2493
    %v2510 = vadd.f32 %v2478, %v2494
    %v2511 = vadd.f32 %v2479, %v2495
    %v2512 = vadd.f32 %v2480, %v2496
    %v2513 = vadd.f32 %v2481, %v2497
    %v2514 = vadd.f32 %v2482, %v2498
    %v2515 = vadd.f32 %v2483, %v2499
    %v2516 = vadd.f32 %v2500, %v1622
    %v2517 = vadd.f32 %v2501, %v1627
    %v2518 = vadd.f32 %v2502, %v1632
    %v2519 = vadd.f32 %v2503, %v1637
    %v2520 = vadd.f32 %v2504, %v1642
    %v2521 = vadd.f32 %v2505, %v1647
    %v2522 = vadd.f32 %v2506, %v1652
    %v2523 = vadd.f32 %v2507, %v1657
    %v2524 = vadd.f32 %v2508, %v1662
    %v2525 = vadd.f32 %v2509, %v1667
    %v2526 = vadd.f32 %v2510, %v1672
    %v2527 = vadd.f32 %v2511, %v1677
    %v2528 = vadd.f32 %v2512, %v1682
    %v2529 = vadd.f32 %v2513, %v1687
    %v2530 = vadd.f32 %v2514, %v1692
    %v2531 = vadd.f32 %v2515, %v1697
    %2532 = vmatprep.subr.mxu0 0.0
    %2533 = vmatpush1.xpose.msra.mxu0 %v2516
    %2534 = vmatprep.subr.mxu0 0.0
    %2535 = vmatpush1.xpose.msra.mxu0 %v2517
    %2536 = vmatprep.subr.mxu0 0.0
    %2537 = vmatpush1.xpose.msra.mxu0 %v2518
    %2538 = vmatprep.subr.mxu0 0.0
    %2539 = vmatpush1.xpose.msra.mxu0 %v2519
    %2540 = vmatprep.subr.mxu0 0.0
    %2541 = vmatpush1.xpose.msra.mxu0 %v2520
    %2542 = vmatprep.subr.mxu0 0.0
    %2543 = vmatpush1.xpose.msra.mxu0 %v2521
    %2544 = vmatprep.subr.mxu0 0.0
    %2545 = vmatpush1.xpose.msra.mxu0 %v2522
    %2546 = vmatprep.subr.mxu0 0.0
    %2547 = vmatpush1.xpose.msra.mxu0 %v2523
    %2548 = vmatprep.subr.mxu0 0.0
    %2549 = vmatpush1.xpose.msra.mxu0 %v2524
    %2550 = vmatprep.subr.mxu0 0.0
    %2551 = vmatpush1.xpose.msra.mxu0 %v2525
    %2552 = vmatprep.subr.mxu0 0.0
    %2553 = vmatpush1.xpose.msra.mxu0 %v2526
    %2554 = vmatprep.subr.mxu0 0.0
    %2555 = vmatpush1.xpose.msra.mxu0 %v2527
    %2556 = vmatprep.subr.mxu0 0.0
    %2557 = vmatpush1.xpose.msra.mxu0 %v2528
    %2558 = vmatprep.subr.mxu0 0.0
    %2559 = vmatpush1.xpose.msra.mxu0 %v2529
    %2560 = vmatprep.subr.mxu0 0.0
    %2561 = vmatpush1.xpose.msra.mxu0 %v2530
    %2562 = vmatprep.subr.mxu0 0.0
    %2563 = vmatpush1.xpose.msra.mxu0 %v2531
    %2564 = vmatprep.subr.mxu0 0.0
    %2565 = vmatpush1.xpose.msra.mxu0 0.0
    %2566 = vmatprep.subr.mxu0 0.0
    %2567 = vmatpush1.xpose.msra.mxu0 0.0
    %2568 = vmatprep.subr.mxu0 0.0
    %2569 = vmatpush1.xpose.msra.mxu0 0.0
    %2570 = vmatprep.subr.mxu0 0.0
    %2571 = vmatpush1.xpose.msra.mxu0 0.0
    %2572 = vmatprep.subr.mxu0 0.0
    %2573 = vmatpush1.xpose.msra.mxu0 0.0
    %2574 = vmatprep.subr.mxu0 0.0
    %2575 = vmatpush1.xpose.msra.mxu0 0.0
    %2576 = vmatprep.subr.mxu0 0.0
    %2577 = vmatpush1.xpose.msra.mxu0 0.0
    %2578 = vmatprep.subr.mxu0 0.0
    %2579 = vmatpush1.xpose.msra.mxu0 0.0
    %2580 = vmatprep.subr.mxu0 0.0
    %2581 = vmatpush1.xpose.msra.mxu0 0.0
    %2582 = vmatprep.subr.mxu0 0.0
    %2583 = vmatpush1.xpose.msra.mxu0 0.0
    %2584 = vmatprep.subr.mxu0 0.0
    %2585 = vmatpush1.xpose.msra.mxu0 0.0
    %2586 = vmatprep.subr.mxu0 0.0
    %2587 = vmatpush1.xpose.msra.mxu0 0.0
    %2588 = vmatprep.subr.mxu0 0.0
    %2589 = vmatpush1.xpose.msra.mxu0 0.0
    %2590 = vmatprep.subr.mxu0 0.0
    %2591 = vmatpush1.xpose.msra.mxu0 0.0
    %2592 = vmatprep.subr.mxu0 0.0
    %2593 = vmatpush1.xpose.msra.mxu0 0.0
    %2594 = vmatprep.subr.mxu0 0.0
    %2595 = vmatpush1.xpose.msra.mxu0 0.0
    %2596 = vmatprep.mubr.f32.mxu0 0.0
    %2597 = vmatmul.mubr.f32.gmra.mrb[0].mxu0 1.0
    %v2598 = vpop.f32.mrb[0].mxu0
    %v2599 = vadd.f32 0.0, %v2598
    %v2600 = vpop.f32.mrb[0].mxu0
    %2601 = vdwg.mxu0
    %2602 = vst [vmem:[#allocation5] sm:$0x1] %v2599
    // Predicated region
    $region42: #{_gnn_fused.1} parent=1 // pred_check
      _
    $region43: #{_gnn_fused.1} parent=1 // pred_check_branch
      %2604 = sbr.rel (0) target = $region45
    $region44: #{_gnn_fused.1} parent=1 // pred_region
      _
    $region45: #{_gnn_fused.1} parent=1 // pred_fallthru
      _
    // Predicated region
    $region46: #{_gnn_fused.1} parent=1 // pred_check
      _
    $region47: #{_gnn_fused.1} parent=1 // pred_check_branch
      %2606 = sbr.rel (0) target = $region49
    $region48: #{_gnn_fused.1} parent=1 // pred_region
      _
    $region49: #{_gnn_fused.1} parent=1 // pred_fallthru
      _
    // Predicated region
    $region50: #{_gnn_fused.1} parent=1 // pred_check
      _
    $region51: #{_gnn_fused.1} parent=1 // pred_check_branch
      %2608 = sbr.rel (0) target = $region53
    $region52: #{_gnn_fused.1} parent=1 // pred_region
      %s2610 = ssub.s32 16, 16
      %2611 = vsyncadd [#allocation4], %s2610
      %s2613 = sshll.u32 [#allocation5], 4
      %s2614 = int_to_ptr.vmem [resolvable:$true] %s2613
      %2616 = dma.vmem_to_hbm [thread:$0]  %s2614, 16, %s11, [#allocation4]
    $region53: #{_gnn_fused.1} parent=1 // pred_fallthru
      _
    // Predicated region
    $region54: #{_gnn_fused.1} parent=1 // pred_check
      _
    $region55: #{_gnn_fused.1} parent=1 // pred_check_branch
      %2618 = sbr.rel (0) target = $region57
    $region56: #{_gnn_fused.1} parent=1 // pred_region
      _
    $region57: #{_gnn_fused.1} parent=1 // pred_fallthru
      _
    // Predicated region
    $region58: #{_gnn_fused.1} parent=1 // pred_check
      _
    $region59: #{_gnn_fused.1} parent=1 // pred_check_branch
      %2620 = sbr.rel (0) target = $region61
    $region60: #{_gnn_fused.1} parent=1 // pred_region
      _
    $region61: #{_gnn_fused.1} parent=1 // pred_fallthru
      _
    // Predicated region
    $region62: #{_gnn_fused.1} parent=1 // pred_check
      _
    $region63: #{_gnn_fused.1} parent=1 // pred_check_branch
      %2622 = sbr.rel (0) target = $region65
    $region64: #{_gnn_fused.1} parent=1 // pred_region
      %2623 = dma.done [#allocation4], 16
    $region65: #{_gnn_fused.1} parent=1 // pred_fallthru
      _
    %2624 = vsyncpa [#allocation3], 1
    %2625 = vsyncpa [#allocation4], 1

</llo_original>
